<compile_context>
chip_gen: v7x
topology: tpu7x:2x2x1
jax: 0.10.0
libtpu: 0.0.40
codegen_flags: <defaults>
</compile_context>

<pallas_src>
import math
import functools

import jax
import jax.numpy as jnp
from jax.experimental import pallas as pl
from jax.experimental.pallas import tpu as pltpu


def _block_kernel(n_embd, n_head, eps, has_mask, *refs):
    if has_mask:
        (x_ref, mask_ref, wqkv_ref, wo_ref, cos_ref, sin_ref,
         s1_ref, s2_ref, w1_ref, w2_ref, w3_ref, o_ref) = refs
    else:
        (x_ref, wqkv_ref, wo_ref, cos_ref, sin_ref,
         s1_ref, s2_ref, w1_ref, w2_ref, w3_ref, o_ref) = refs
        mask_ref = None

    C = n_embd
    hs = C // n_head
    hs2 = hs // 2
    f32 = jnp.float32
    bf16 = jnp.bfloat16

    x = x_ref[0].astype(f32)                                    # (T, C)
    T = x.shape[0]

    # ---- RMSNorm 1 ----
    ms = jnp.mean(x * x, axis=-1, keepdims=True)
    xn = x * jax.lax.rsqrt(ms + eps) * s1_ref[...]

    # ---- fused QKV projection (bf16 MXU, f32 accumulation), stored bf16 ----
    qkv = jnp.dot(xn.astype(bf16), wqkv_ref[...],
                  preferred_element_type=f32).astype(bf16)       # (T, 3C) bf16

    # ---- attention bias (hoisted out of the head loop) ----
    row = jax.lax.broadcasted_iota(jnp.int32, (T, T), 0)
    col = jax.lax.broadcasted_iota(jnp.int32, (T, T), 1)
    neg = jnp.float32(-1e30)
    if has_mask:
        bias = jnp.where(row >= col, mask_ref[0].astype(f32), neg)   # (T, T)
    else:
        bias = jnp.where(row >= col, jnp.float32(0.0), neg)

    cosv = cos_ref[...]                                          # (T, hs2) f32
    sinv = sin_ref[...]

    # ---- attention: per-head, accumulating directly into the output projection ----
    y = jnp.zeros((T, C), f32)
    # TODO(synk): for n_head >= 8 use lax.fori_loop(unroll=2..4) over heads (per-head
    #             accumulate makes that possible); static unroll is right at these sizes.
    for h in range(n_head):
        qh = qkv[:, h * hs:(h + 1) * hs]                 # bf16 (1/sqrt(hs) folded into W_q)
        kh = qkv[:, C + h * hs:C + (h + 1) * hs]
        vh = qkv[:, 2 * C + h * hs:2 * C + (h + 1) * hs]

        # rotate-half RoPE (q/k weight columns pre-deinterleaved per head on the host):
        #   out = [x1*cos - x2*sin, x2*cos + x1*sin]
        q1, q2 = qh[:, :hs2], qh[:, hs2:]
        k1, k2 = kh[:, :hs2], kh[:, hs2:]
        qr = jnp.concatenate([q1 * cosv - q2 * sinv, q2 * cosv + q1 * sinv], -1).astype(bf16)
        kr = jnp.concatenate([k1 * cosv - k2 * sinv, k2 * cosv + k1 * sinv], -1).astype(bf16)

        s = jax.lax.dot_general(qr, kr, (((1,), (1,)), ((), ())),
                                preferred_element_type=f32)
        s = s + bias                                     # scale already folded into W_q
        s = s - jnp.max(s, axis=-1, keepdims=True)
        p = jnp.exp(s)                                   # unnormalized
        inv = pl.reciprocal(jnp.sum(p, axis=-1, keepdims=True), approx=False)
        oh = jnp.dot(p.astype(bf16), vh, preferred_element_type=f32) * inv     # (T, hs)
        # per-head accumulation (no lane concat of head outputs):
        y = y + jnp.dot(oh.astype(bf16), wo_ref[h * hs:(h + 1) * hs, :],
                        preferred_element_type=f32)

    x = x + y                                            # residual 1

    # ---- RMSNorm 2 + SwiGLU MLP ----
    ms2 = jnp.mean(x * x, axis=-1, keepdims=True)
    xn2 = (x * jax.lax.rsqrt(ms2 + eps) * s2_ref[...]).astype(bf16)
    h1 = jnp.dot(xn2, w1_ref[...], preferred_element_type=f32)
    h2 = jnp.dot(xn2, w2_ref[...], preferred_element_type=f32)
    g = (h1 * jax.nn.sigmoid(h1)) * h2                   # silu(h1) * h2
    mo = jnp.dot(g.astype(bf16), w3_ref[...], preferred_element_type=f32)
    o_ref[0] = (x + mo).astype(o_ref.dtype)              # residual 2


def deinterleave_qk_columns(wqkv, n_embd, n_head):
    """Permute the q/k output columns of the fused QKV weight into per-head rotate-half
    order [even indices | odd indices].  Semantics-preserving: q and k get the same per-head
    permutation so q.k scores are unchanged; v / W_out are untouched."""
    hs = n_embd // n_head
    within = jnp.concatenate([jnp.arange(0, hs, 2), jnp.arange(1, hs, 2)])          # (hs,)
    per_head = (jnp.arange(n_head)[:, None] * hs + within[None, :]).reshape(-1)     # (C,)
    perm = jnp.concatenate([per_head, n_embd + per_head, 2 * n_embd + jnp.arange(n_embd)])
    return jnp.take(wqkv, perm, axis=1)


def prepare_params(params, n_embd, n_head):
    """One-time host-side weight prep: deinterleave q/k columns, fold 1/sqrt(head_size) into
    the q columns (commutes with the RoPE rotation), cast all Linear weights to bf16."""
    hs = n_embd // n_head
    p = dict(params)
    wqkv = deinterleave_qk_columns(params["wqkv"], n_embd, n_head)
    col_scale = jnp.concatenate([
        jnp.full((n_embd,), 1.0 / math.sqrt(hs), jnp.float32),      # q columns
        jnp.ones((2 * n_embd,), jnp.float32)])                      # k, v columns
    p["wqkv"] = (wqkv * col_scale[None, :]).astype(jnp.bfloat16)
    for k in ("wo", "w1", "w2", "w3"):
        p[k] = params[k].astype(jnp.bfloat16)
    return p


def llama_block(x, attention_mask, prep, cos_half, sin_half, *, n_head, eps=1e-5):
    """attention_mask may be None (purely causal): the (B,T,T) mask DMA is then skipped."""
    B, T, C = x.shape
    assert C % n_head == 0 and (C // n_head) % 2 == 0
    hs2 = (C // n_head) // 2
    n_hidden = prep["w1"].shape[1]
    has_mask = attention_mask is not None
    kernel = functools.partial(_block_kernel, C, n_head, eps, has_mask)

    const = dict(pipeline_mode=pl.Buffered(1))   # grid-invariant inputs: single-buffered
    in_specs = [pl.BlockSpec((1, T, C), lambda b: (b, 0, 0))]             # x
    args = [x]
    if has_mask:
        in_specs.append(pl.BlockSpec((1, T, T), lambda b: (b, 0, 0)))     # additive mask
        args.append(attention_mask)
    in_specs += [
        pl.BlockSpec((C, 3 * C), lambda b: (0, 0), **const),     # W_qkv (bf16, deinterleaved, q pre-scaled)
        pl.BlockSpec((C, C), lambda b: (0, 0), **const),         # W_out (bf16)
        pl.BlockSpec((T, hs2), lambda b: (0, 0), **const),       # rope cos (per-pair freqs)
        pl.BlockSpec((T, hs2), lambda b: (0, 0), **const),       # rope sin
        pl.BlockSpec((1, C), lambda b: (0, 0), **const),         # rms1 scale
        pl.BlockSpec((1, C), lambda b: (0, 0), **const),         # rms2 scale
        pl.BlockSpec((C, n_hidden), lambda b: (0, 0), **const),  # W_fc1 (bf16)
        pl.BlockSpec((C, n_hidden), lambda b: (0, 0), **const),  # W_fc2 (bf16)
        pl.BlockSpec((n_hidden, C), lambda b: (0, 0), **const),  # W_proj (bf16)
    ]
    args += [prep["wqkv"], prep["wo"], cos_half, sin_half,
             prep["s1"], prep["s2"], prep["w1"], prep["w2"], prep["w3"]]

    # Rough VMEM budget: single-buffered bf16 weights + double-buffered activations (+ mask).
    def nbytes(shape, dt):
        return math.prod(shape) * jnp.dtype(dt).itemsize
    est = (2 * 2 * nbytes((T, C), x.dtype)
           + nbytes((C, 3 * C), jnp.bfloat16) + nbytes((C, C), jnp.bfloat16)
           + 2 * nbytes((C, n_hidden), jnp.bfloat16) + nbytes((n_hidden, C), jnp.bfloat16)
           + 2 * nbytes((T, hs2), jnp.float32) + 2 * nbytes((1, C), jnp.float32)
           + 3 * nbytes((T, 3 * C), jnp.bfloat16))          # live bf16 intermediates
    if has_mask:
        est += 2 * nbytes((T, T), attention_mask.dtype)

    # Generation-aware VMEM cap: v7x has 64 MiB physical, v5e/v6e 128 MiB. Stay <= ~75%.
    try:
        vmem_cap = int(pltpu.get_tpu_info().vmem_capacity_bytes)
    except Exception:  # conservative fallback
        vmem_cap = 64 * 2 ** 20
    vmem_limit = int(min(int(0.75 * vmem_cap), max(32 * 2 ** 20, 4 * est)))

    # TODO(synk): on v7x (2 TensorCores) add a second parallel grid axis (query-row tile or
    #             head group) when B == 1 so both cores get work; B >= 2 here already does.
    return pl.pallas_call(
        kernel,
        out_shape=jax.ShapeDtypeStruct((B, T, C), x.dtype),
        grid=(B,),
        in_specs=in_specs,
        out_specs=pl.BlockSpec((1, T, C), lambda b: (b, 0, 0)),
        compiler_params=pltpu.CompilerParams(
            dimension_semantics=("parallel",),
            vmem_limit_bytes=vmem_limit),
    )(*args)


def init_params(key, n_embd, n_head):
    hidden = 4 * n_embd
    n_hidden = int(2 * hidden / 3)
    N = 256
    n_hidden = (n_hidden - 1) // N * N + N
    ks = jax.random.split(key, 5)

    def lin(k, fan_in, fan_out):   # nn.Linear-style uniform(-1/sqrt(fan_in), 1/sqrt(fan_in))
        bound = 1.0 / math.sqrt(fan_in)
        return jax.random.uniform(k, (fan_in, fan_out), jnp.float32, -bound, bound)

    return dict(
        wqkv=lin(ks[0], n_embd, 3 * n_embd),
        wo=lin(ks[1], n_embd, n_embd),
        w1=lin(ks[2], n_embd, n_hidden),
        w2=lin(ks[3], n_embd, n_hidden),
        w3=lin(ks[4], n_hidden, n_embd),
        s1=jnp.ones((1, n_embd), jnp.float32),   # RMSNorm scales init to ones (as in module)
        s2=jnp.ones((1, n_embd), jnp.float32),
    )


def build_rope(T, n_embd, n_head, base=10000.0):
    """Returns cos/sin of shape (T, head_size//2) — one entry per rotation pair."""
    hs = n_embd // n_head
    freqs = 1.0 / (base ** (jnp.arange(0, hs, 2, dtype=jnp.float32) / hs))   # (hs//2,)
    ang = jnp.outer(jnp.arange(T, dtype=jnp.float32), freqs)                 # (T, hs//2)
    return jnp.cos(ang), jnp.sin(ang)


def ref_block(x, mask, params, cos, sin, n_head, eps=1e-5):
    """Pure-JAX reference mirroring the PyTorch Block forward (interleaved RoPE, original
    weight layout) with the same bf16 operand rounding the kernel uses."""
    B, T, C = x.shape
    hs = C // n_head
    hs2 = hs // 2
    f32 = jnp.float32

    def bw(name):
        return params[name].astype(jnp.bfloat16).astype(f32)

    def bf(a):
        return a.astype(jnp.bfloat16).astype(f32)

    def rms(z, s):
        return z * jax.lax.rsqrt(jnp.mean(z * z, axis=-1, keepdims=True) + eps) * s

    xn = rms(x, params["s1"])
    qkv = bf(xn) @ bw("wqkv")
    q, k, v = qkv[..., :C], qkv[..., C:2 * C], qkv[..., 2 * C:]
    q, k, v = bf(q), bf(k), bf(v)          # model the kernel's bf16 QKV storage

    def rope(z):                                       # z: (B, T, H, hs) interleaved pairs
        zr = z.reshape(B, T, n_head, hs2, 2)
        ze, zo = zr[..., 0], zr[..., 1]
        c = cos[None, :, None, :]
        s = sin[None, :, None, :]
        return jnp.stack([ze * c - zo * s, ze * s + zo * c], axis=-1).reshape(B, T, n_head, hs)

    qh = rope(q.reshape(B, T, n_head, hs)).transpose(0, 2, 1, 3)
    kh = rope(k.reshape(B, T, n_head, hs)).transpose(0, 2, 1, 3)
    vh = v.reshape(B, T, n_head, hs).transpose(0, 2, 1, 3)

    s = jnp.einsum("bhqd,bhkd->bhqk", bf(qh), bf(kh)) / math.sqrt(hs)
    causal = jnp.tril(jnp.ones((T, T), bool))
    s = s + jnp.where(causal, mask[:, None, :, :], jnp.float32(-1e30))
    s = s - s.max(-1, keepdims=True)
    p = jnp.exp(s)
    o = jnp.einsum("bhqk,bhkd->bhqd", bf(p), bf(vh)) / p.sum(-1, keepdims=True)
    y = o.transpose(0, 2, 1, 3).reshape(B, T, C)
    x = x + bf(y) @ bw("wo")

    xn2 = rms(x, params["s2"])
    h1 = bf(xn2) @ bw("w1")
    h2 = bf(xn2) @ bw("w2")
    g = (h1 * jax.nn.sigmoid(h1)) * h2
    return x + bf(g) @ bw("w3")


if __name__ == "__main__":
    B, T, n_embd, n_head = 2, 8, 32, 4
    key = jax.random.PRNGKey(0)
    kx, kp = jax.random.split(key)
    x = jax.random.normal(kx, (B, T, n_embd), jnp.float32)

    params = init_params(kp, n_embd, n_head)
    cos_half, sin_half = build_rope(T, n_embd, n_head)
    prep = prepare_params(params, n_embd, n_head)

    # Fast path: no user mask -> the dense (B, T, T) mask DMA is skipped entirely; the
    # causal bias is built from iota in-kernel.
    out = llama_block(x, None, prep, cos_half, sin_half, n_head=n_head)
    out = jax.block_until_ready(out)
    assert out.shape == (B, T, n_embd)
    ref = ref_block(x, jnp.zeros((B, T, T), jnp.float32), params, cos_half, sin_half, n_head)
    err = float(jnp.max(jnp.abs(out - ref)))
    assert jnp.allclose(out, ref, atol=1e-2, rtol=1e-2), err

    # Explicit additive-mask path (e.g. padding): finite large-negative bias values.
    # TODO(synk): -inf-valued user masks on fully-masked rows yield NaN (same as SDPA).
    mask = jnp.zeros((B, T, T), jnp.float32).at[1, :, T - 2:].set(-1e9)
    out2 = jax.block_until_ready(llama_block(x, mask, prep, cos_half, sin_half, n_head=n_head))
    ref2 = ref_block(x, mask, params, cos_half, sin_half, n_head)
    err2 = float(jnp.max(jnp.abs(out2 - ref2)))
    assert jnp.allclose(out2, ref2, atol=1e-2, rtol=1e-2), err2

    print("KERNEL_OK")
</pallas_src>

<mosaic_0001>
module attributes {stable_mosaic.version = 11 : i64} {
  func.func @_block_kernel(%arg0: i32, %arg1: memref<1x8x32xf32, #tpu.memory_space<vmem>>, %arg2: memref<32x96xbf16, #tpu.memory_space<vmem>>, %arg3: memref<32x32xbf16, #tpu.memory_space<vmem>>, %arg4: memref<8x4xf32, #tpu.memory_space<vmem>>, %arg5: memref<8x4xf32, #tpu.memory_space<vmem>>, %arg6: memref<1x32xf32, #tpu.memory_space<vmem>>, %arg7: memref<1x32xf32, #tpu.memory_space<vmem>>, %arg8: memref<32x256xbf16, #tpu.memory_space<vmem>>, %arg9: memref<32x256xbf16, #tpu.memory_space<vmem>>, %arg10: memref<256x32xbf16, #tpu.memory_space<vmem>>, %arg11: memref<1x8x32xf32, #tpu.memory_space<vmem>>) attributes {dimension_semantics = [#tpu.dimension_semantics<parallel>], iteration_bounds = array<i64: 2>, scalar_prefetch = 0 : i64, scratch_operands = 0 : i64, tpu.core_type = #tpu.core_type<tc>, window_params = [{transform_indices = @transform_0, window_bounds = array<i64: 1, 8, 32>}, {pipeline_mode = #tpu.pipeline_mode<synchronous>, transform_indices = @transform_1, window_bounds = array<i64: 32, 96>}, {pipeline_mode = #tpu.pipeline_mode<synchronous>, transform_indices = @transform_2, window_bounds = array<i64: 32, 32>}, {pipeline_mode = #tpu.pipeline_mode<synchronous>, transform_indices = @transform_3, window_bounds = array<i64: 8, 4>}, {pipeline_mode = #tpu.pipeline_mode<synchronous>, transform_indices = @transform_4, window_bounds = array<i64: 8, 4>}, {pipeline_mode = #tpu.pipeline_mode<synchronous>, transform_indices = @transform_5, window_bounds = array<i64: 1, 32>}, {pipeline_mode = #tpu.pipeline_mode<synchronous>, transform_indices = @transform_6, window_bounds = array<i64: 1, 32>}, {pipeline_mode = #tpu.pipeline_mode<synchronous>, transform_indices = @transform_7, window_bounds = array<i64: 32, 256>}, {pipeline_mode = #tpu.pipeline_mode<synchronous>, transform_indices = @transform_8, window_bounds = array<i64: 32, 256>}, {pipeline_mode = #tpu.pipeline_mode<synchronous>, transform_indices = @transform_9, window_bounds = array<i64: 256, 32>}, {transform_indices = @transform_10, window_bounds = array<i64: 1, 8, 32>}]} {
    %c0 = arith.constant 0 : index
    %c0_0 = arith.constant 0 : index
    %c0_1 = arith.constant 0 : index
    %0 = vector.load %arg1[%c0, %c0_0, %c0_1] : memref<1x8x32xf32, #tpu.memory_space<vmem>>, vector<1x8x32xf32>
    %1 = vector.shape_cast %0 : vector<1x8x32xf32> to vector<8x32xf32>
    %2 = arith.mulf %1, %1 : vector<8x32xf32>
    %cst = arith.constant dense<0.000000e+00> : vector<8xf32>
    %3 = vector.multi_reduction <add>, %2, %cst [1] : vector<8x32xf32> to vector<8xf32>
    %4 = vector.shape_cast %3 : vector<8xf32> to vector<8x1xf32>
    %cst_2 = arith.constant 3.200000e+01 : f32
    %5 = vector.broadcast %cst_2 : f32 to vector<8x1xf32>
    %6 = arith.divf %4, %5 : vector<8x1xf32>
    %cst_3 = arith.constant 9.99999974E-6 : f32
    %7 = vector.broadcast %cst_3 : f32 to vector<8x1xf32>
    %8 = arith.addf %6, %7 : vector<8x1xf32>
    %9 = math.rsqrt %8 : vector<8x1xf32>
    %10 = vector.broadcast %9 : vector<8x1xf32> to vector<8x32xf32>
    %11 = arith.mulf %1, %10 : vector<8x32xf32>
    %c0_4 = arith.constant 0 : index
    %c0_5 = arith.constant 0 : index
    %12 = vector.load %arg6[%c0_4, %c0_5] : memref<1x32xf32, #tpu.memory_space<vmem>>, vector<1x32xf32>
    %13 = vector.broadcast %12 : vector<1x32xf32> to vector<8x32xf32>
    %14 = arith.mulf %11, %13 : vector<8x32xf32>
    %15 = arith.truncf %14 : vector<8x32xf32> to vector<8x32xbf16>
    %c0_6 = arith.constant 0 : index
    %c0_7 = arith.constant 0 : index
    %16 = vector.load %arg2[%c0_6, %c0_7] : memref<32x96xbf16, #tpu.memory_space<vmem>>, vector<32x96xbf16>
    %cst_8 = arith.constant dense<0.000000e+00> : vector<8x96xf32>
    %17 = tpu.matmul %15, %16, %cst_8 {dimension_numbers = #tpu.dot_dimension_numbers<[1], [0], [0], [1], [0, 0, 1, 1], [], []>} : vector<8x32xbf16>, vector<32x96xbf16>, vector<8x96xf32> -> vector<8x96xf32>
    %18 = arith.truncf %17 : vector<8x96xf32> to vector<8x96xbf16>
    %19 = tpu.iota {dimensions = array<i32: 0>} : vector<8x8xi32>
    %20 = tpu.iota {dimensions = array<i32: 1>} : vector<8x8xi32>
    %21 = arith.cmpi sge, %19, %20 : vector<8x8xi32>
    %cst_9 = arith.constant 0.000000e+00 : f32
    %cst_10 = arith.constant -1.000000e+30 : f32
    %22 = vector.broadcast %cst_9 : f32 to vector<8x8xf32>
    %23 = vector.broadcast %cst_10 : f32 to vector<8x8xf32>
    %24 = arith.select %21, %22, %23 : vector<8x8xi1>, vector<8x8xf32>
    %c0_11 = arith.constant 0 : index
    %c0_12 = arith.constant 0 : index
    %25 = vector.load %arg4[%c0_11, %c0_12] : memref<8x4xf32, #tpu.memory_space<vmem>>, vector<8x4xf32>
    %c0_13 = arith.constant 0 : index
    %c0_14 = arith.constant 0 : index
    %26 = vector.load %arg5[%c0_13, %c0_14] : memref<8x4xf32, #tpu.memory_space<vmem>>, vector<8x4xf32>
    %cst_15 = arith.constant 0.000000e+00 : f32
    %27 = vector.broadcast %cst_15 : f32 to vector<8x32xf32>
    %28 = vector.extract_strided_slice %18 {offsets = [0, 0], sizes = [8, 8], strides = [1, 1]} : vector<8x96xbf16> to vector<8x8xbf16>
    %29 = vector.extract_strided_slice %18 {offsets = [0, 32], sizes = [8, 8], strides = [1, 1]} : vector<8x96xbf16> to vector<8x8xbf16>
    %30 = vector.extract_strided_slice %18 {offsets = [0, 64], sizes = [8, 8], strides = [1, 1]} : vector<8x96xbf16> to vector<8x8xbf16>
    %31 = vector.extract_strided_slice %28 {offsets = [0, 0], sizes = [8, 4], strides = [1, 1]} : vector<8x8xbf16> to vector<8x4xbf16>
    %32 = vector.extract_strided_slice %28 {offsets = [0, 4], sizes = [8, 4], strides = [1, 1]} : vector<8x8xbf16> to vector<8x4xbf16>
    %33 = vector.extract_strided_slice %29 {offsets = [0, 0], sizes = [8, 4], strides = [1, 1]} : vector<8x8xbf16> to vector<8x4xbf16>
    %34 = vector.extract_strided_slice %29 {offsets = [0, 4], sizes = [8, 4], strides = [1, 1]} : vector<8x8xbf16> to vector<8x4xbf16>
    %35 = arith.extf %31 : vector<8x4xbf16> to vector<8x4xf32>
    %36 = arith.mulf %35, %25 : vector<8x4xf32>
    %37 = arith.extf %32 : vector<8x4xbf16> to vector<8x4xf32>
    %38 = arith.mulf %37, %26 : vector<8x4xf32>
    %39 = arith.subf %36, %38 : vector<8x4xf32>
    %40 = arith.extf %32 : vector<8x4xbf16> to vector<8x4xf32>
    %41 = arith.mulf %40, %25 : vector<8x4xf32>
    %42 = arith.extf %31 : vector<8x4xbf16> to vector<8x4xf32>
    %43 = arith.mulf %42, %26 : vector<8x4xf32>
    %44 = arith.addf %41, %43 : vector<8x4xf32>
    %45 = tpu.concatenate %39, %44 in 1 : vector<8x4xf32>, vector<8x4xf32> -> vector<8x8xf32>
    %46 = arith.truncf %45 : vector<8x8xf32> to vector<8x8xbf16>
    %47 = arith.extf %33 : vector<8x4xbf16> to vector<8x4xf32>
    %48 = arith.mulf %47, %25 : vector<8x4xf32>
    %49 = arith.extf %34 : vector<8x4xbf16> to vector<8x4xf32>
    %50 = arith.mulf %49, %26 : vector<8x4xf32>
    %51 = arith.subf %48, %50 : vector<8x4xf32>
    %52 = arith.extf %34 : vector<8x4xbf16> to vector<8x4xf32>
    %53 = arith.mulf %52, %25 : vector<8x4xf32>
    %54 = arith.extf %33 : vector<8x4xbf16> to vector<8x4xf32>
    %55 = arith.mulf %54, %26 : vector<8x4xf32>
    %56 = arith.addf %53, %55 : vector<8x4xf32>
    %57 = tpu.concatenate %51, %56 in 1 : vector<8x4xf32>, vector<8x4xf32> -> vector<8x8xf32>
    %58 = arith.truncf %57 : vector<8x8xf32> to vector<8x8xbf16>
    %cst_16 = arith.constant dense<0.000000e+00> : vector<8x8xf32>
    %59 = tpu.matmul %46, %58, %cst_16 {dimension_numbers = #tpu.dot_dimension_numbers<[1], [1], [0], [0], [0, 0, 1, 0], [], []>} : vector<8x8xbf16>, vector<8x8xbf16>, vector<8x8xf32> -> vector<8x8xf32>
    %60 = arith.addf %59, %24 : vector<8x8xf32>
    %cst_17 = arith.constant dense<0xFF800000> : vector<8xf32>
    %61 = vector.multi_reduction <maximumf>, %60, %cst_17 [1] : vector<8x8xf32> to vector<8xf32>
    %62 = vector.shape_cast %61 : vector<8xf32> to vector<8x1xf32>
    %63 = vector.broadcast %62 : vector<8x1xf32> to vector<8x8xf32>
    %64 = arith.subf %60, %63 : vector<8x8xf32>
    %65 = math.exp %64 : vector<8x8xf32>
    %cst_18 = arith.constant dense<0.000000e+00> : vector<8xf32>
    %66 = vector.multi_reduction <add>, %65, %cst_18 [1] : vector<8x8xf32> to vector<8xf32>
    %67 = vector.shape_cast %66 : vector<8xf32> to vector<8x1xf32>
    %68 = tpu.reciprocal %67 : vector<8x1xf32> -> vector<8x1xf32>
    %69 = arith.truncf %65 : vector<8x8xf32> to vector<8x8xbf16>
    %cst_19 = arith.constant dense<0.000000e+00> : vector<8x8xf32>
    %70 = tpu.matmul %69, %30, %cst_19 {dimension_numbers = #tpu.dot_dimension_numbers<[1], [0], [0], [1], [0, 0, 1, 1], [], []>} : vector<8x8xbf16>, vector<8x8xbf16>, vector<8x8xf32> -> vector<8x8xf32>
    %71 = vector.broadcast %68 : vector<8x1xf32> to vector<8x8xf32>
    %72 = arith.mulf %70, %71 : vector<8x8xf32>
    %73 = arith.truncf %72 : vector<8x8xf32> to vector<8x8xbf16>
    %c0_20 = arith.constant 0 : index
    %c0_21 = arith.constant 0 : index
    %74 = vector.load %arg3[%c0_20, %c0_21] : memref<32x32xbf16, #tpu.memory_space<vmem>>, vector<8x32xbf16>
    %cst_22 = arith.constant dense<0.000000e+00> : vector<8x32xf32>
    %75 = tpu.matmul %73, %74, %cst_22 {dimension_numbers = #tpu.dot_dimension_numbers<[1], [0], [0], [1], [0, 0, 1, 1], [], []>} : vector<8x8xbf16>, vector<8x32xbf16>, vector<8x32xf32> -> vector<8x32xf32>
    %76 = arith.addf %27, %75 : vector<8x32xf32>
    %77 = vector.extract_strided_slice %18 {offsets = [0, 8], sizes = [8, 8], strides = [1, 1]} : vector<8x96xbf16> to vector<8x8xbf16>
    %78 = vector.extract_strided_slice %18 {offsets = [0, 40], sizes = [8, 8], strides = [1, 1]} : vector<8x96xbf16> to vector<8x8xbf16>
    %79 = vector.extract_strided_slice %18 {offsets = [0, 72], sizes = [8, 8], strides = [1, 1]} : vector<8x96xbf16> to vector<8x8xbf16>
    %80 = vector.extract_strided_slice %77 {offsets = [0, 0], sizes = [8, 4], strides = [1, 1]} : vector<8x8xbf16> to vector<8x4xbf16>
    %81 = vector.extract_strided_slice %77 {offsets = [0, 4], sizes = [8, 4], strides = [1, 1]} : vector<8x8xbf16> to vector<8x4xbf16>
    %82 = vector.extract_strided_slice %78 {offsets = [0, 0], sizes = [8, 4], strides = [1, 1]} : vector<8x8xbf16> to vector<8x4xbf16>
    %83 = vector.extract_strided_slice %78 {offsets = [0, 4], sizes = [8, 4], strides = [1, 1]} : vector<8x8xbf16> to vector<8x4xbf16>
    %84 = arith.extf %80 : vector<8x4xbf16> to vector<8x4xf32>
    %85 = arith.mulf %84, %25 : vector<8x4xf32>
    %86 = arith.extf %81 : vector<8x4xbf16> to vector<8x4xf32>
    %87 = arith.mulf %86, %26 : vector<8x4xf32>
    %88 = arith.subf %85, %87 : vector<8x4xf32>
    %89 = arith.extf %81 : vector<8x4xbf16> to vector<8x4xf32>
    %90 = arith.mulf %89, %25 : vector<8x4xf32>
    %91 = arith.extf %80 : vector<8x4xbf16> to vector<8x4xf32>
    %92 = arith.mulf %91, %26 : vector<8x4xf32>
    %93 = arith.addf %90, %92 : vector<8x4xf32>
    %94 = tpu.concatenate %88, %93 in 1 : vector<8x4xf32>, vector<8x4xf32> -> vector<8x8xf32>
    %95 = arith.truncf %94 : vector<8x8xf32> to vector<8x8xbf16>
    %96 = arith.extf %82 : vector<8x4xbf16> to vector<8x4xf32>
    %97 = arith.mulf %96, %25 : vector<8x4xf32>
    %98 = arith.extf %83 : vector<8x4xbf16> to vector<8x4xf32>
    %99 = arith.mulf %98, %26 : vector<8x4xf32>
    %100 = arith.subf %97, %99 : vector<8x4xf32>
    %101 = arith.extf %83 : vector<8x4xbf16> to vector<8x4xf32>
    %102 = arith.mulf %101, %25 : vector<8x4xf32>
    %103 = arith.extf %82 : vector<8x4xbf16> to vector<8x4xf32>
    %104 = arith.mulf %103, %26 : vector<8x4xf32>
    %105 = arith.addf %102, %104 : vector<8x4xf32>
    %106 = tpu.concatenate %100, %105 in 1 : vector<8x4xf32>, vector<8x4xf32> -> vector<8x8xf32>
    %107 = arith.truncf %106 : vector<8x8xf32> to vector<8x8xbf16>
    %cst_23 = arith.constant dense<0.000000e+00> : vector<8x8xf32>
    %108 = tpu.matmul %95, %107, %cst_23 {dimension_numbers = #tpu.dot_dimension_numbers<[1], [1], [0], [0], [0, 0, 1, 0], [], []>} : vector<8x8xbf16>, vector<8x8xbf16>, vector<8x8xf32> -> vector<8x8xf32>
    %109 = arith.addf %108, %24 : vector<8x8xf32>
    %cst_24 = arith.constant dense<0xFF800000> : vector<8xf32>
    %110 = vector.multi_reduction <maximumf>, %109, %cst_24 [1] : vector<8x8xf32> to vector<8xf32>
    %111 = vector.shape_cast %110 : vector<8xf32> to vector<8x1xf32>
    %112 = vector.broadcast %111 : vector<8x1xf32> to vector<8x8xf32>
    %113 = arith.subf %109, %112 : vector<8x8xf32>
    %114 = math.exp %113 : vector<8x8xf32>
    %cst_25 = arith.constant dense<0.000000e+00> : vector<8xf32>
    %115 = vector.multi_reduction <add>, %114, %cst_25 [1] : vector<8x8xf32> to vector<8xf32>
    %116 = vector.shape_cast %115 : vector<8xf32> to vector<8x1xf32>
    %117 = tpu.reciprocal %116 : vector<8x1xf32> -> vector<8x1xf32>
    %118 = arith.truncf %114 : vector<8x8xf32> to vector<8x8xbf16>
    %cst_26 = arith.constant dense<0.000000e+00> : vector<8x8xf32>
    %119 = tpu.matmul %118, %79, %cst_26 {dimension_numbers = #tpu.dot_dimension_numbers<[1], [0], [0], [1], [0, 0, 1, 1], [], []>} : vector<8x8xbf16>, vector<8x8xbf16>, vector<8x8xf32> -> vector<8x8xf32>
    %120 = vector.broadcast %117 : vector<8x1xf32> to vector<8x8xf32>
    %121 = arith.mulf %119, %120 : vector<8x8xf32>
    %122 = arith.truncf %121 : vector<8x8xf32> to vector<8x8xbf16>
    %c8 = arith.constant 8 : index
    %c0_27 = arith.constant 0 : index
    %123 = vector.load %arg3[%c8, %c0_27] : memref<32x32xbf16, #tpu.memory_space<vmem>>, vector<8x32xbf16>
    %cst_28 = arith.constant dense<0.000000e+00> : vector<8x32xf32>
    %124 = tpu.matmul %122, %123, %cst_28 {dimension_numbers = #tpu.dot_dimension_numbers<[1], [0], [0], [1], [0, 0, 1, 1], [], []>} : vector<8x8xbf16>, vector<8x32xbf16>, vector<8x32xf32> -> vector<8x32xf32>
    %125 = arith.addf %76, %124 : vector<8x32xf32>
    %126 = vector.extract_strided_slice %18 {offsets = [0, 16], sizes = [8, 8], strides = [1, 1]} : vector<8x96xbf16> to vector<8x8xbf16>
    %127 = vector.extract_strided_slice %18 {offsets = [0, 48], sizes = [8, 8], strides = [1, 1]} : vector<8x96xbf16> to vector<8x8xbf16>
    %128 = vector.extract_strided_slice %18 {offsets = [0, 80], sizes = [8, 8], strides = [1, 1]} : vector<8x96xbf16> to vector<8x8xbf16>
    %129 = vector.extract_strided_slice %126 {offsets = [0, 0], sizes = [8, 4], strides = [1, 1]} : vector<8x8xbf16> to vector<8x4xbf16>
    %130 = vector.extract_strided_slice %126 {offsets = [0, 4], sizes = [8, 4], strides = [1, 1]} : vector<8x8xbf16> to vector<8x4xbf16>
    %131 = vector.extract_strided_slice %127 {offsets = [0, 0], sizes = [8, 4], strides = [1, 1]} : vector<8x8xbf16> to vector<8x4xbf16>
    %132 = vector.extract_strided_slice %127 {offsets = [0, 4], sizes = [8, 4], strides = [1, 1]} : vector<8x8xbf16> to vector<8x4xbf16>
    %133 = arith.extf %129 : vector<8x4xbf16> to vector<8x4xf32>
    %134 = arith.mulf %133, %25 : vector<8x4xf32>
    %135 = arith.extf %130 : vector<8x4xbf16> to vector<8x4xf32>
    %136 = arith.mulf %135, %26 : vector<8x4xf32>
    %137 = arith.subf %134, %136 : vector<8x4xf32>
    %138 = arith.extf %130 : vector<8x4xbf16> to vector<8x4xf32>
    %139 = arith.mulf %138, %25 : vector<8x4xf32>
    %140 = arith.extf %129 : vector<8x4xbf16> to vector<8x4xf32>
    %141 = arith.mulf %140, %26 : vector<8x4xf32>
    %142 = arith.addf %139, %141 : vector<8x4xf32>
    %143 = tpu.concatenate %137, %142 in 1 : vector<8x4xf32>, vector<8x4xf32> -> vector<8x8xf32>
    %144 = arith.truncf %143 : vector<8x8xf32> to vector<8x8xbf16>
    %145 = arith.extf %131 : vector<8x4xbf16> to vector<8x4xf32>
    %146 = arith.mulf %145, %25 : vector<8x4xf32>
    %147 = arith.extf %132 : vector<8x4xbf16> to vector<8x4xf32>
    %148 = arith.mulf %147, %26 : vector<8x4xf32>
    %149 = arith.subf %146, %148 : vector<8x4xf32>
    %150 = arith.extf %132 : vector<8x4xbf16> to vector<8x4xf32>
    %151 = arith.mulf %150, %25 : vector<8x4xf32>
    %152 = arith.extf %131 : vector<8x4xbf16> to vector<8x4xf32>
    %153 = arith.mulf %152, %26 : vector<8x4xf32>
    %154 = arith.addf %151, %153 : vector<8x4xf32>
    %155 = tpu.concatenate %149, %154 in 1 : vector<8x4xf32>, vector<8x4xf32> -> vector<8x8xf32>
    %156 = arith.truncf %155 : vector<8x8xf32> to vector<8x8xbf16>
    %cst_29 = arith.constant dense<0.000000e+00> : vector<8x8xf32>
    %157 = tpu.matmul %144, %156, %cst_29 {dimension_numbers = #tpu.dot_dimension_numbers<[1], [1], [0], [0], [0, 0, 1, 0], [], []>} : vector<8x8xbf16>, vector<8x8xbf16>, vector<8x8xf32> -> vector<8x8xf32>
    %158 = arith.addf %157, %24 : vector<8x8xf32>
    %cst_30 = arith.constant dense<0xFF800000> : vector<8xf32>
    %159 = vector.multi_reduction <maximumf>, %158, %cst_30 [1] : vector<8x8xf32> to vector<8xf32>
    %160 = vector.shape_cast %159 : vector<8xf32> to vector<8x1xf32>
    %161 = vector.broadcast %160 : vector<8x1xf32> to vector<8x8xf32>
    %162 = arith.subf %158, %161 : vector<8x8xf32>
    %163 = math.exp %162 : vector<8x8xf32>
    %cst_31 = arith.constant dense<0.000000e+00> : vector<8xf32>
    %164 = vector.multi_reduction <add>, %163, %cst_31 [1] : vector<8x8xf32> to vector<8xf32>
    %165 = vector.shape_cast %164 : vector<8xf32> to vector<8x1xf32>
    %166 = tpu.reciprocal %165 : vector<8x1xf32> -> vector<8x1xf32>
    %167 = arith.truncf %163 : vector<8x8xf32> to vector<8x8xbf16>
    %cst_32 = arith.constant dense<0.000000e+00> : vector<8x8xf32>
    %168 = tpu.matmul %167, %128, %cst_32 {dimension_numbers = #tpu.dot_dimension_numbers<[1], [0], [0], [1], [0, 0, 1, 1], [], []>} : vector<8x8xbf16>, vector<8x8xbf16>, vector<8x8xf32> -> vector<8x8xf32>
    %169 = vector.broadcast %166 : vector<8x1xf32> to vector<8x8xf32>
    %170 = arith.mulf %168, %169 : vector<8x8xf32>
    %171 = arith.truncf %170 : vector<8x8xf32> to vector<8x8xbf16>
    %c16 = arith.constant 16 : index
    %c0_33 = arith.constant 0 : index
    %172 = vector.load %arg3[%c16, %c0_33] : memref<32x32xbf16, #tpu.memory_space<vmem>>, vector<8x32xbf16>
    %cst_34 = arith.constant dense<0.000000e+00> : vector<8x32xf32>
    %173 = tpu.matmul %171, %172, %cst_34 {dimension_numbers = #tpu.dot_dimension_numbers<[1], [0], [0], [1], [0, 0, 1, 1], [], []>} : vector<8x8xbf16>, vector<8x32xbf16>, vector<8x32xf32> -> vector<8x32xf32>
    %174 = arith.addf %125, %173 : vector<8x32xf32>
    %175 = vector.extract_strided_slice %18 {offsets = [0, 24], sizes = [8, 8], strides = [1, 1]} : vector<8x96xbf16> to vector<8x8xbf16>
    %176 = vector.extract_strided_slice %18 {offsets = [0, 56], sizes = [8, 8], strides = [1, 1]} : vector<8x96xbf16> to vector<8x8xbf16>
    %177 = vector.extract_strided_slice %18 {offsets = [0, 88], sizes = [8, 8], strides = [1, 1]} : vector<8x96xbf16> to vector<8x8xbf16>
    %178 = vector.extract_strided_slice %175 {offsets = [0, 0], sizes = [8, 4], strides = [1, 1]} : vector<8x8xbf16> to vector<8x4xbf16>
    %179 = vector.extract_strided_slice %175 {offsets = [0, 4], sizes = [8, 4], strides = [1, 1]} : vector<8x8xbf16> to vector<8x4xbf16>
    %180 = vector.extract_strided_slice %176 {offsets = [0, 0], sizes = [8, 4], strides = [1, 1]} : vector<8x8xbf16> to vector<8x4xbf16>
    %181 = vector.extract_strided_slice %176 {offsets = [0, 4], sizes = [8, 4], strides = [1, 1]} : vector<8x8xbf16> to vector<8x4xbf16>
    %182 = arith.extf %178 : vector<8x4xbf16> to vector<8x4xf32>
    %183 = arith.mulf %182, %25 : vector<8x4xf32>
    %184 = arith.extf %179 : vector<8x4xbf16> to vector<8x4xf32>
    %185 = arith.mulf %184, %26 : vector<8x4xf32>
    %186 = arith.subf %183, %185 : vector<8x4xf32>
    %187 = arith.extf %179 : vector<8x4xbf16> to vector<8x4xf32>
    %188 = arith.mulf %187, %25 : vector<8x4xf32>
    %189 = arith.extf %178 : vector<8x4xbf16> to vector<8x4xf32>
    %190 = arith.mulf %189, %26 : vector<8x4xf32>
    %191 = arith.addf %188, %190 : vector<8x4xf32>
    %192 = tpu.concatenate %186, %191 in 1 : vector<8x4xf32>, vector<8x4xf32> -> vector<8x8xf32>
    %193 = arith.truncf %192 : vector<8x8xf32> to vector<8x8xbf16>
    %194 = arith.extf %180 : vector<8x4xbf16> to vector<8x4xf32>
    %195 = arith.mulf %194, %25 : vector<8x4xf32>
    %196 = arith.extf %181 : vector<8x4xbf16> to vector<8x4xf32>
    %197 = arith.mulf %196, %26 : vector<8x4xf32>
    %198 = arith.subf %195, %197 : vector<8x4xf32>
    %199 = arith.extf %181 : vector<8x4xbf16> to vector<8x4xf32>
    %200 = arith.mulf %199, %25 : vector<8x4xf32>
    %201 = arith.extf %180 : vector<8x4xbf16> to vector<8x4xf32>
    %202 = arith.mulf %201, %26 : vector<8x4xf32>
    %203 = arith.addf %200, %202 : vector<8x4xf32>
    %204 = tpu.concatenate %198, %203 in 1 : vector<8x4xf32>, vector<8x4xf32> -> vector<8x8xf32>
    %205 = arith.truncf %204 : vector<8x8xf32> to vector<8x8xbf16>
    %cst_35 = arith.constant dense<0.000000e+00> : vector<8x8xf32>
    %206 = tpu.matmul %193, %205, %cst_35 {dimension_numbers = #tpu.dot_dimension_numbers<[1], [1], [0], [0], [0, 0, 1, 0], [], []>} : vector<8x8xbf16>, vector<8x8xbf16>, vector<8x8xf32> -> vector<8x8xf32>
    %207 = arith.addf %206, %24 : vector<8x8xf32>
    %cst_36 = arith.constant dense<0xFF800000> : vector<8xf32>
    %208 = vector.multi_reduction <maximumf>, %207, %cst_36 [1] : vector<8x8xf32> to vector<8xf32>
    %209 = vector.shape_cast %208 : vector<8xf32> to vector<8x1xf32>
    %210 = vector.broadcast %209 : vector<8x1xf32> to vector<8x8xf32>
    %211 = arith.subf %207, %210 : vector<8x8xf32>
    %212 = math.exp %211 : vector<8x8xf32>
    %cst_37 = arith.constant dense<0.000000e+00> : vector<8xf32>
    %213 = vector.multi_reduction <add>, %212, %cst_37 [1] : vector<8x8xf32> to vector<8xf32>
    %214 = vector.shape_cast %213 : vector<8xf32> to vector<8x1xf32>
    %215 = tpu.reciprocal %214 : vector<8x1xf32> -> vector<8x1xf32>
    %216 = arith.truncf %212 : vector<8x8xf32> to vector<8x8xbf16>
    %cst_38 = arith.constant dense<0.000000e+00> : vector<8x8xf32>
    %217 = tpu.matmul %216, %177, %cst_38 {dimension_numbers = #tpu.dot_dimension_numbers<[1], [0], [0], [1], [0, 0, 1, 1], [], []>} : vector<8x8xbf16>, vector<8x8xbf16>, vector<8x8xf32> -> vector<8x8xf32>
    %218 = vector.broadcast %215 : vector<8x1xf32> to vector<8x8xf32>
    %219 = arith.mulf %217, %218 : vector<8x8xf32>
    %220 = arith.truncf %219 : vector<8x8xf32> to vector<8x8xbf16>
    %c24 = arith.constant 24 : index
    %c0_39 = arith.constant 0 : index
    %221 = vector.load %arg3[%c24, %c0_39] : memref<32x32xbf16, #tpu.memory_space<vmem>>, vector<8x32xbf16>
    %cst_40 = arith.constant dense<0.000000e+00> : vector<8x32xf32>
    %222 = tpu.matmul %220, %221, %cst_40 {dimension_numbers = #tpu.dot_dimension_numbers<[1], [0], [0], [1], [0, 0, 1, 1], [], []>} : vector<8x8xbf16>, vector<8x32xbf16>, vector<8x32xf32> -> vector<8x32xf32>
    %223 = arith.addf %174, %222 : vector<8x32xf32>
    %224 = arith.addf %1, %223 : vector<8x32xf32>
    %225 = arith.mulf %224, %224 : vector<8x32xf32>
    %cst_41 = arith.constant dense<0.000000e+00> : vector<8xf32>
    %226 = vector.multi_reduction <add>, %225, %cst_41 [1] : vector<8x32xf32> to vector<8xf32>
    %227 = vector.shape_cast %226 : vector<8xf32> to vector<8x1xf32>
    %cst_42 = arith.constant 3.200000e+01 : f32
    %228 = vector.broadcast %cst_42 : f32 to vector<8x1xf32>
    %229 = arith.divf %227, %228 : vector<8x1xf32>
    %cst_43 = arith.constant 9.99999974E-6 : f32
    %230 = vector.broadcast %cst_43 : f32 to vector<8x1xf32>
    %231 = arith.addf %229, %230 : vector<8x1xf32>
    %232 = math.rsqrt %231 : vector<8x1xf32>
    %233 = vector.broadcast %232 : vector<8x1xf32> to vector<8x32xf32>
    %234 = arith.mulf %224, %233 : vector<8x32xf32>
    %c0_44 = arith.constant 0 : index
    %c0_45 = arith.constant 0 : index
    %235 = vector.load %arg7[%c0_44, %c0_45] : memref<1x32xf32, #tpu.memory_space<vmem>>, vector<1x32xf32>
    %236 = vector.broadcast %235 : vector<1x32xf32> to vector<8x32xf32>
    %237 = arith.mulf %234, %236 : vector<8x32xf32>
    %238 = arith.truncf %237 : vector<8x32xf32> to vector<8x32xbf16>
    %c0_46 = arith.constant 0 : index
    %c0_47 = arith.constant 0 : index
    %239 = vector.load %arg8[%c0_46, %c0_47] : memref<32x256xbf16, #tpu.memory_space<vmem>>, vector<32x256xbf16>
    %cst_48 = arith.constant dense<0.000000e+00> : vector<8x256xf32>
    %240 = tpu.matmul %238, %239, %cst_48 {dimension_numbers = #tpu.dot_dimension_numbers<[1], [0], [0], [1], [0, 0, 1, 1], [], []>} : vector<8x32xbf16>, vector<32x256xbf16>, vector<8x256xf32> -> vector<8x256xf32>
    %c0_49 = arith.constant 0 : index
    %c0_50 = arith.constant 0 : index
    %241 = vector.load %arg9[%c0_49, %c0_50] : memref<32x256xbf16, #tpu.memory_space<vmem>>, vector<32x256xbf16>
    %cst_51 = arith.constant dense<0.000000e+00> : vector<8x256xf32>
    %242 = tpu.matmul %238, %241, %cst_51 {dimension_numbers = #tpu.dot_dimension_numbers<[1], [0], [0], [1], [0, 0, 1, 1], [], []>} : vector<8x32xbf16>, vector<32x256xbf16>, vector<8x256xf32> -> vector<8x256xf32>
    %243 = arith.negf %240 : vector<8x256xf32>
    %244 = math.exp %243 : vector<8x256xf32>
    %cst_52 = arith.constant 1.000000e+00 : f32
    %245 = vector.broadcast %cst_52 : f32 to vector<8x256xf32>
    %246 = arith.addf %245, %244 : vector<8x256xf32>
    %247 = arith.divf %245, %246 : vector<8x256xf32>
    %248 = arith.mulf %240, %247 : vector<8x256xf32>
    %249 = arith.mulf %248, %242 : vector<8x256xf32>
    %250 = arith.truncf %249 : vector<8x256xf32> to vector<8x256xbf16>
    %c0_53 = arith.constant 0 : index
    %c0_54 = arith.constant 0 : index
    %251 = vector.load %arg10[%c0_53, %c0_54] : memref<256x32xbf16, #tpu.memory_space<vmem>>, vector<256x32xbf16>
    %cst_55 = arith.constant dense<0.000000e+00> : vector<8x32xf32>
    %252 = tpu.matmul %250, %251, %cst_55 {dimension_numbers = #tpu.dot_dimension_numbers<[1], [0], [0], [1], [0, 0, 1, 1], [], []>} : vector<8x256xbf16>, vector<256x32xbf16>, vector<8x32xf32> -> vector<8x32xf32>
    %253 = arith.addf %224, %252 : vector<8x32xf32>
    %c0_56 = arith.constant 0 : index
    %c0_57 = arith.constant 0 : index
    %c0_58 = arith.constant 0 : index
    %254 = vector.load %arg11[%c0_56, %c0_57, %c0_58] : memref<1x8x32xf32, #tpu.memory_space<vmem>>, vector<1x8x32xf32>
    %255 = vector.shape_cast %254 : vector<1x8x32xf32> to vector<8x32xf32>
    %256 = vector.shape_cast %253 : vector<8x32xf32> to vector<1x8x32xf32>
    tpu.vector_store %arg11[%c0_56, %c0_57, %c0_58], %256 {strides = array<i32>} : memref<1x8x32xf32, #tpu.memory_space<vmem>>, vector<1x8x32xf32>,
    return
  }
  func.func @transform_0(%arg0: i32) -> (i32, i32, i32) {
    %c0_i32 = arith.constant 0 : i32
    %c0_i32_0 = arith.constant 0 : i32
    %c0_i32_1 = arith.constant 0 : i32
    return %arg0, %c0_i32, %c0_i32_0 : i32, i32, i32
  }
  func.func @transform_1(%arg0: i32) -> (i32, i32) {
    %c0_i32 = arith.constant 0 : i32
    %c0_i32_0 = arith.constant 0 : i32
    %c0_i32_1 = arith.constant 0 : i32
    return %c0_i32, %c0_i32_0 : i32, i32
  }
  func.func @transform_2(%arg0: i32) -> (i32, i32) {
    %c0_i32 = arith.constant 0 : i32
    %c0_i32_0 = arith.constant 0 : i32
    %c0_i32_1 = arith.constant 0 : i32
    return %c0_i32, %c0_i32_0 : i32, i32
  }
  func.func @transform_3(%arg0: i32) -> (i32, i32) {
    %c0_i32 = arith.constant 0 : i32
    %c0_i32_0 = arith.constant 0 : i32
    %c0_i32_1 = arith.constant 0 : i32
    return %c0_i32, %c0_i32_0 : i32, i32
  }
  func.func @transform_4(%arg0: i32) -> (i32, i32) {
    %c0_i32 = arith.constant 0 : i32
    %c0_i32_0 = arith.constant 0 : i32
    %c0_i32_1 = arith.constant 0 : i32
    return %c0_i32, %c0_i32_0 : i32, i32
  }
  func.func @transform_5(%arg0: i32) -> (i32, i32) {
    %c0_i32 = arith.constant 0 : i32
    %c0_i32_0 = arith.constant 0 : i32
    %c0_i32_1 = arith.constant 0 : i32
    return %c0_i32, %c0_i32_0 : i32, i32
  }
  func.func @transform_6(%arg0: i32) -> (i32, i32) {
    %c0_i32 = arith.constant 0 : i32
    %c0_i32_0 = arith.constant 0 : i32
    %c0_i32_1 = arith.constant 0 : i32
    return %c0_i32, %c0_i32_0 : i32, i32
  }
  func.func @transform_7(%arg0: i32) -> (i32, i32) {
    %c0_i32 = arith.constant 0 : i32
    %c0_i32_0 = arith.constant 0 : i32
    %c0_i32_1 = arith.constant 0 : i32
    return %c0_i32, %c0_i32_0 : i32, i32
  }
  func.func @transform_8(%arg0: i32) -> (i32, i32) {
    %c0_i32 = arith.constant 0 : i32
    %c0_i32_0 = arith.constant 0 : i32
    %c0_i32_1 = arith.constant 0 : i32
    return %c0_i32, %c0_i32_0 : i32, i32
  }
  func.func @transform_9(%arg0: i32) -> (i32, i32) {
    %c0_i32 = arith.constant 0 : i32
    %c0_i32_0 = arith.constant 0 : i32
    %c0_i32_1 = arith.constant 0 : i32
    return %c0_i32, %c0_i32_0 : i32, i32
  }
  func.func @transform_10(%arg0: i32) -> (i32, i32, i32) {
    %c0_i32 = arith.constant 0 : i32
    %c0_i32_0 = arith.constant 0 : i32
    %c0_i32_1 = arith.constant 0 : i32
    return %arg0, %c0_i32, %c0_i32_0 : i32, i32, i32
  }
}

</mosaic_0001>

<llo_original>
// kernel: tpu_custom_call.1
$region0: #{tpu_custom_call.1}
  #allocation0 [shape = 'u32[]', space=smem, size = 0x4, offset = 0x4, fixed_abs, tag = 'smem constant byte address 0x4 - core index']
  #allocation1 [shape = 'u32[144,128]{1,0:T(1,128)}', space=vmem, size = 0x12000, scoped, tag = 'internal scratch']
  %s0 = inlined_call_operand.vmem [shape: f32[2,8,32], index: 0, kind: input, shape index: {}]
  %s1 = inlined_call_operand.vmem [shape: bf16[32,96], index: 1, kind: input, shape index: {}]
  %s2 = inlined_call_operand.vmem [shape: bf16[32,32], index: 2, kind: input, shape index: {}]
  %s3 = inlined_call_operand.vmem [shape: f32[8,4], index: 3, kind: input, shape index: {}]
  %s4 = inlined_call_operand.vmem [shape: f32[8,4], index: 4, kind: input, shape index: {}]
  %s5 = inlined_call_operand.vmem [shape: f32[1,32], index: 5, kind: input, shape index: {}]
  %s6 = inlined_call_operand.vmem [shape: f32[1,32], index: 6, kind: input, shape index: {}]
  %s7 = inlined_call_operand.vmem [shape: bf16[32,256], index: 7, kind: input, shape index: {}]
  %s8 = inlined_call_operand.vmem [shape: bf16[32,256], index: 8, kind: input, shape index: {}]
  %s9 = inlined_call_operand.vmem [shape: bf16[256,32], index: 9, kind: input, shape index: {}]
  %s10 = inlined_call_operand.hbm [shape: f32[2,8,32], index: 10, kind: output, shape index: {}]
  %s11 = sld [smem:[#allocation0]]
  $region73: #{tpu_custom_call.1} parent=0
    _
  %s13 = ssub.s32 1, %s11
  %s14 = scalar_select 0, %s13, %s11
  $region1: #{tpu_custom_call.1} parent=0
    #allocation2 [shape = 'u8[8192]{0}', space=vmem, size = 0x2000, scoped, tag = 'output window, operand 0']
    #allocation3 [shape = 's32[2]{0}', space=sflag, size = 0x8, scoped, tag = 'scoped memory for tpu_custom_call.1']
    %15 = vsyncpa [#allocation3], 0
    %s16 = scalar_lea.sflag [#allocation3], 1
    %17 = vsyncpa %s16, 0
    loop: start=0, step=1, limit=4
    $region2: #{tpu_custom_call.1} parent=1 // loop_pre_header
      _
    $region3: #{tpu_custom_call.1} parent=1 // loop_header
      %s19 = sphi 0, %s23
      %p20 = scmp.ge.s32.totalorder %s19, 4
      %s29 = sphi 0, %s31
      %s32 = sphi 0, %s29
      %s33 = sphi 0, %s32
      %s49 = sphi 0, %s33
      %s53 = sphi 0, %s53
      %s55 = sphi 0, %s53
      %s56 = sphi 0, %s55
      %s70 = sphi 0, %s56
      %s74 = sphi 0, %s74
      %s76 = sphi 0, %s74
      %s77 = sphi 0, %s76
      %s91 = sphi 0, %s77
      %s95 = sphi 0, %s95
      %s97 = sphi 0, %s95
      %s98 = sphi 0, %s97
      %s112 = sphi 0, %s98
      %s116 = sphi 0, %s116
      %s118 = sphi 0, %s116
      %s119 = sphi 0, %s118
      %s133 = sphi 0, %s119
      %s137 = sphi 0, %s137
      %s139 = sphi 0, %s137
      %s140 = sphi 0, %s139
      %s154 = sphi 0, %s140
      %s158 = sphi 0, %s158
      %s160 = sphi 0, %s158
      %s161 = sphi 0, %s160
      %s175 = sphi 0, %s161
      %s179 = sphi 0, %s179
      %s181 = sphi 0, %s179
      %s182 = sphi 0, %s181
      %s196 = sphi 0, %s182
      %s200 = sphi 0, %s200
      %s202 = sphi 0, %s200
      %s203 = sphi 0, %s202
      %s217 = sphi 0, %s203
      %s221 = sphi 0, %s221
      %s223 = sphi 0, %s221
      %s224 = sphi 0, %s223
      %s238 = sphi 0, %s224
      %s244 = sphi 0, %s246
      %s247 = sphi 0, %s244
      %s248 = sphi 0, %s247
      %s264 = sphi 0, %s248
    $region4: #{tpu_custom_call.1} parent=1 // loop_header_branch
      %22 = sbr.rel (%p20) target = $region8
    $region5: #{tpu_custom_call.1} parent=1 // loop_body
      %s24 = ssub.s32 %s19, 1
      %s25 = ssub.s32 %s19, 2
      %s26 = sadd.s32 %s19, 1
      %s27 = ssub.s32 %s19, %s26
      %p28 = scmp.eq.s32.totalorder %s27, 0
      %s30 = sadd.s32 %s29, 1
      %s31 = scalar_select %p28, %s29, %s30
      %p34 = pneg %p28
      %p35 = scmp.eq.s32.totalorder %s19, 1
      %p36 = por %p34, %p35
      %p37 = scmp.ne.s32.totalorder %s29, %s32
      %p38 = scmp.eq.s32.totalorder %s19, 0
      %p39 = por %p37, %p38
      %p40 = scmp.ne.s32.totalorder %s29, %s32
      %p41 = scmp.eq.s32.totalorder %s24, 1
      %p42 = por %p40, %p41
      %p43 = scmp.ne.s32.totalorder %s32, %s33
      %p44 = scmp.eq.s32.totalorder %s24, 0
      %p45 = por %p43, %p44
      %p46 = scmp.ne.s32.totalorder %s32, %s33
      %p47 = scmp.eq.s32.totalorder %s25, 1
      %p48 = por %p46, %p47
      %p50 = scmp.ne.s32.totalorder %s33, %s49
      %p51 = scmp.eq.s32.totalorder %s25, 0
      %p52 = por %p50, %p51
      %s54 = sadd.s32 %s53, 1
      %p57 = scmp.eq.s32.totalorder %s19, 1
      %p58 = scmp.ne.s32.totalorder %s53, %s55
      %p59 = scmp.eq.s32.totalorder %s19, 0
      %p60 = por %p58, %p59
      %p61 = scmp.ne.s32.totalorder %s53, %s55
      %p62 = scmp.eq.s32.totalorder %s24, 1
      %p63 = por %p61, %p62
      %p64 = scmp.ne.s32.totalorder %s55, %s56
      %p65 = scmp.eq.s32.totalorder %s24, 0
      %p66 = por %p64, %p65
      %p67 = scmp.ne.s32.totalorder %s55, %s56
      %p68 = scmp.eq.s32.totalorder %s25, 1
      %p69 = por %p67, %p68
      %p71 = scmp.ne.s32.totalorder %s56, %s70
      %p72 = scmp.eq.s32.totalorder %s25, 0
      %p73 = por %p71, %p72
      %s75 = sadd.s32 %s74, 1
      %p78 = scmp.eq.s32.totalorder %s19, 1
      %p79 = scmp.ne.s32.totalorder %s74, %s76
      %p80 = scmp.eq.s32.totalorder %s19, 0
      %p81 = por %p79, %p80
      %p82 = scmp.ne.s32.totalorder %s74, %s76
      %p83 = scmp.eq.s32.totalorder %s24, 1
      %p84 = por %p82, %p83
      %p85 = scmp.ne.s32.totalorder %s76, %s77
      %p86 = scmp.eq.s32.totalorder %s24, 0
      %p87 = por %p85, %p86
      %p88 = scmp.ne.s32.totalorder %s76, %s77
      %p89 = scmp.eq.s32.totalorder %s25, 1
      %p90 = por %p88, %p89
      %p92 = scmp.ne.s32.totalorder %s77, %s91
      %p93 = scmp.eq.s32.totalorder %s25, 0
      %p94 = por %p92, %p93
      %s96 = sadd.s32 %s95, 1
      %p99 = scmp.eq.s32.totalorder %s19, 1
      %p100 = scmp.ne.s32.totalorder %s95, %s97
      %p101 = scmp.eq.s32.totalorder %s19, 0
      %p102 = por %p100, %p101
      %p103 = scmp.ne.s32.totalorder %s95, %s97
      %p104 = scmp.eq.s32.totalorder %s24, 1
      %p105 = por %p103, %p104
      %p106 = scmp.ne.s32.totalorder %s97, %s98
      %p107 = scmp.eq.s32.totalorder %s24, 0
      %p108 = por %p106, %p107
      %p109 = scmp.ne.s32.totalorder %s97, %s98
      %p110 = scmp.eq.s32.totalorder %s25, 1
      %p111 = por %p109, %p110
      %p113 = scmp.ne.s32.totalorder %s98, %s112
      %p114 = scmp.eq.s32.totalorder %s25, 0
      %p115 = por %p113, %p114
      %s117 = sadd.s32 %s116, 1
      %p120 = scmp.eq.s32.totalorder %s19, 1
      %p121 = scmp.ne.s32.totalorder %s116, %s118
      %p122 = scmp.eq.s32.totalorder %s19, 0
      %p123 = por %p121, %p122
      %p124 = scmp.ne.s32.totalorder %s116, %s118
      %p125 = scmp.eq.s32.totalorder %s24, 1
      %p126 = por %p124, %p125
      %p127 = scmp.ne.s32.totalorder %s118, %s119
      %p128 = scmp.eq.s32.totalorder %s24, 0
      %p129 = por %p127, %p128
      %p130 = scmp.ne.s32.totalorder %s118, %s119
      %p131 = scmp.eq.s32.totalorder %s25, 1
      %p132 = por %p130, %p131
      %p134 = scmp.ne.s32.totalorder %s119, %s133
      %p135 = scmp.eq.s32.totalorder %s25, 0
      %p136 = por %p134, %p135
      %s138 = sadd.s32 %s137, 1
      %p141 = scmp.eq.s32.totalorder %s19, 1
      %p142 = scmp.ne.s32.totalorder %s137, %s139
      %p143 = scmp.eq.s32.totalorder %s19, 0
      %p144 = por %p142, %p143
      %p145 = scmp.ne.s32.totalorder %s137, %s139
      %p146 = scmp.eq.s32.totalorder %s24, 1
      %p147 = por %p145, %p146
      %p148 = scmp.ne.s32.totalorder %s139, %s140
      %p149 = scmp.eq.s32.totalorder %s24, 0
      %p150 = por %p148, %p149
      %p151 = scmp.ne.s32.totalorder %s139, %s140
      %p152 = scmp.eq.s32.totalorder %s25, 1
      %p153 = por %p151, %p152
      %p155 = scmp.ne.s32.totalorder %s140, %s154
      %p156 = scmp.eq.s32.totalorder %s25, 0
      %p157 = por %p155, %p156
      %s159 = sadd.s32 %s158, 1
      %p162 = scmp.eq.s32.totalorder %s19, 1
      %p163 = scmp.ne.s32.totalorder %s158, %s160
      %p164 = scmp.eq.s32.totalorder %s19, 0
      %p165 = por %p163, %p164
      %p166 = scmp.ne.s32.totalorder %s158, %s160
      %p167 = scmp.eq.s32.totalorder %s24, 1
      %p168 = por %p166, %p167
      %p169 = scmp.ne.s32.totalorder %s160, %s161
      %p170 = scmp.eq.s32.totalorder %s24, 0
      %p171 = por %p169, %p170
      %p172 = scmp.ne.s32.totalorder %s160, %s161
      %p173 = scmp.eq.s32.totalorder %s25, 1
      %p174 = por %p172, %p173
      %p176 = scmp.ne.s32.totalorder %s161, %s175
      %p177 = scmp.eq.s32.totalorder %s25, 0
      %p178 = por %p176, %p177
      %s180 = sadd.s32 %s179, 1
      %p183 = scmp.eq.s32.totalorder %s19, 1
      %p184 = scmp.ne.s32.totalorder %s179, %s181
      %p185 = scmp.eq.s32.totalorder %s19, 0
      %p186 = por %p184, %p185
      %p187 = scmp.ne.s32.totalorder %s179, %s181
      %p188 = scmp.eq.s32.totalorder %s24, 1
      %p189 = por %p187, %p188
      %p190 = scmp.ne.s32.totalorder %s181, %s182
      %p191 = scmp.eq.s32.totalorder %s24, 0
      %p192 = por %p190, %p191
      %p193 = scmp.ne.s32.totalorder %s181, %s182
      %p194 = scmp.eq.s32.totalorder %s25, 1
      %p195 = por %p193, %p194
      %p197 = scmp.ne.s32.totalorder %s182, %s196
      %p198 = scmp.eq.s32.totalorder %s25, 0
      %p199 = por %p197, %p198
      %s201 = sadd.s32 %s200, 1
      %p204 = scmp.eq.s32.totalorder %s19, 1
      %p205 = scmp.ne.s32.totalorder %s200, %s202
      %p206 = scmp.eq.s32.totalorder %s19, 0
      %p207 = por %p205, %p206
      %p208 = scmp.ne.s32.totalorder %s200, %s202
      %p209 = scmp.eq.s32.totalorder %s24, 1
      %p210 = por %p208, %p209
      %p211 = scmp.ne.s32.totalorder %s202, %s203
      %p212 = scmp.eq.s32.totalorder %s24, 0
      %p213 = por %p211, %p212
      %p214 = scmp.ne.s32.totalorder %s202, %s203
      %p215 = scmp.eq.s32.totalorder %s25, 1
      %p216 = por %p214, %p215
      %p218 = scmp.ne.s32.totalorder %s203, %s217
      %p219 = scmp.eq.s32.totalorder %s25, 0
      %p220 = por %p218, %p219
      %s222 = sadd.s32 %s221, 1
      %p225 = scmp.eq.s32.totalorder %s19, 1
      %p226 = scmp.ne.s32.totalorder %s221, %s223
      %p227 = scmp.eq.s32.totalorder %s19, 0
      %p228 = por %p226, %p227
      %p229 = scmp.ne.s32.totalorder %s221, %s223
      %p230 = scmp.eq.s32.totalorder %s24, 1
      %p231 = por %p229, %p230
      %p232 = scmp.ne.s32.totalorder %s223, %s224
      %p233 = scmp.eq.s32.totalorder %s24, 0
      %p234 = por %p232, %p233
      %p235 = scmp.ne.s32.totalorder %s223, %s224
      %p236 = scmp.eq.s32.totalorder %s25, 1
      %p237 = por %p235, %p236
      %p239 = scmp.ne.s32.totalorder %s224, %s238
      %p240 = scmp.eq.s32.totalorder %s25, 0
      %p241 = por %p239, %p240
      %s242 = ssub.s32 %s19, %s26
      %p243 = scmp.eq.s32.totalorder %s242, 0
      %s245 = sadd.s32 %s244, 1
      %s246 = scalar_select %p243, %s244, %s245
      %p249 = pneg %p243
      %p250 = scmp.eq.s32.totalorder %s19, 1
      %p251 = por %p249, %p250
      %p252 = scmp.ne.s32.totalorder %s244, %s247
      %p253 = scmp.eq.s32.totalorder %s19, 0
      %p254 = por %p252, %p253
      %p255 = scmp.ne.s32.totalorder %s244, %s247
      %p256 = scmp.eq.s32.totalorder %s24, 1
      %p257 = por %p255, %p256
      %p258 = scmp.ne.s32.totalorder %s247, %s248
      %p259 = scmp.eq.s32.totalorder %s24, 0
      %p260 = por %p258, %p259
      %p261 = scmp.ne.s32.totalorder %s247, %s248
      %p262 = scmp.eq.s32.totalorder %s25, 1
      %p263 = por %p261, %p262
      %p265 = scmp.ne.s32.totalorder %s248, %s264
      %p266 = scmp.eq.s32.totalorder %s25, 0
      %p267 = por %p265, %p266
      %p268 = scmp.le.s32.totalorder 1, %s19
      %p269 = scmp.lt.s32.totalorder %s19, 3
      %p270 = pnand %p268, %p269
      %p271 = pneg %p270
      // Predicated region
      $region9: #{tpu_custom_call.1} parent=5 // pred_check
        _
      $region10: #{tpu_custom_call.1} parent=5 // pred_check_branch
        %273 = sbr.rel (%p270) target = $region12
      $region11: #{tpu_custom_call.1} parent=5 // pred_region
        %s274 = ssub.s32 %s19, 1
        // Predicated region
        $region13: #{tpu_custom_call.1} parent=11 // pred_check
          %p275 = pneg %p66
        $region14: #{tpu_custom_call.1} parent=11 // pred_check_branch
          %277 = sbr.rel (%p275) target = $region16
        $region15: #{tpu_custom_call.1} parent=11 // pred_region
          _
        $region16: #{tpu_custom_call.1} parent=11 // pred_fallthru
          _
        // Predicated region
        $region17: #{tpu_custom_call.1} parent=11 // pred_check
          %p278 = pneg %p87
        $region18: #{tpu_custom_call.1} parent=11 // pred_check_branch
          %280 = sbr.rel (%p278) target = $region20
        $region19: #{tpu_custom_call.1} parent=11 // pred_region
          _
        $region20: #{tpu_custom_call.1} parent=11 // pred_fallthru
          _
        // Predicated region
        $region21: #{tpu_custom_call.1} parent=11 // pred_check
          %p281 = pneg %p108
        $region22: #{tpu_custom_call.1} parent=11 // pred_check_branch
          %283 = sbr.rel (%p281) target = $region24
        $region23: #{tpu_custom_call.1} parent=11 // pred_region
          _
        $region24: #{tpu_custom_call.1} parent=11 // pred_fallthru
          _
        // Predicated region
        $region25: #{tpu_custom_call.1} parent=11 // pred_check
          %p284 = pneg %p129
        $region26: #{tpu_custom_call.1} parent=11 // pred_check_branch
          %286 = sbr.rel (%p284) target = $region28
        $region27: #{tpu_custom_call.1} parent=11 // pred_region
          _
        $region28: #{tpu_custom_call.1} parent=11 // pred_fallthru
          _
        // Predicated region
        $region29: #{tpu_custom_call.1} parent=11 // pred_check
          %p287 = pneg %p150
        $region30: #{tpu_custom_call.1} parent=11 // pred_check_branch
          %289 = sbr.rel (%p287) target = $region32
        $region31: #{tpu_custom_call.1} parent=11 // pred_region
          _
        $region32: #{tpu_custom_call.1} parent=11 // pred_fallthru
          _
        // Predicated region
        $region33: #{tpu_custom_call.1} parent=11 // pred_check
          %p290 = pneg %p171
        $region34: #{tpu_custom_call.1} parent=11 // pred_check_branch
          %292 = sbr.rel (%p290) target = $region36
        $region35: #{tpu_custom_call.1} parent=11 // pred_region
          _
        $region36: #{tpu_custom_call.1} parent=11 // pred_fallthru
          _
        // Predicated region
        $region37: #{tpu_custom_call.1} parent=11 // pred_check
          %p293 = pneg %p192
        $region38: #{tpu_custom_call.1} parent=11 // pred_check_branch
          %295 = sbr.rel (%p293) target = $region40
        $region39: #{tpu_custom_call.1} parent=11 // pred_region
          _
        $region40: #{tpu_custom_call.1} parent=11 // pred_fallthru
          _
        // Predicated region
        $region41: #{tpu_custom_call.1} parent=11 // pred_check
          %p296 = pneg %p213
        $region42: #{tpu_custom_call.1} parent=11 // pred_check_branch
          %298 = sbr.rel (%p296) target = $region44
        $region43: #{tpu_custom_call.1} parent=11 // pred_region
          _
        $region44: #{tpu_custom_call.1} parent=11 // pred_fallthru
          _
        // Predicated region
        $region45: #{tpu_custom_call.1} parent=11 // pred_check
          %p299 = pneg %p234
        $region46: #{tpu_custom_call.1} parent=11 // pred_check_branch
          %301 = sbr.rel (%p299) target = $region48
        $region47: #{tpu_custom_call.1} parent=11 // pred_region
          _
        $region48: #{tpu_custom_call.1} parent=11 // pred_fallthru
          _
      $region12: #{tpu_custom_call.1} parent=5 // pred_fallthru
        _
      %p302 = scmp.lt.s32.totalorder %s19, 2
      // Predicated region
      $region49: #{tpu_custom_call.1} parent=5 // pred_check
        %p303 = pneg %p302
      $region50: #{tpu_custom_call.1} parent=5 // pred_check_branch
        %305 = sbr.rel (%p303) target = $region52
      $region51: #{tpu_custom_call.1} parent=5 // pred_region
        // Predicated region
        $region53: #{tpu_custom_call.1} parent=51 // pred_check
          %p306 = pneg %p39
        $region54: #{tpu_custom_call.1} parent=51 // pred_check_branch
          %308 = sbr.rel (%p306) target = $region56
        $region55: #{tpu_custom_call.1} parent=51 // pred_region
          %p309 = scmp.lt.s32.totalorder %s19, 1
          %s310 = scalar_select %p309, %s19, 1
          %s311 = smul.addr %s310, 8
          %s312 = scalar_lea.vmem %s0, %s311
        $region56: #{tpu_custom_call.1} parent=51 // pred_fallthru
          _
      $region52: #{tpu_custom_call.1} parent=5 // pred_fallthru
        _
      %p313 = scmp.le.s32.totalorder 1, %s19
      %p314 = scmp.lt.s32.totalorder %s19, 3
      %p315 = pnand %p313, %p314
      %p316 = pneg %p315
      // Predicated region
      $region57: #{tpu_custom_call.1} parent=5 // pred_check
        _
      $region58: #{tpu_custom_call.1} parent=5 // pred_check_branch
        %318 = sbr.rel (%p315) target = $region60
      $region59: #{tpu_custom_call.1} parent=5 // pred_region
        %s319 = ssub.s32 %s19, 1
        %p320 = scmp.lt.s32.totalorder %s24, 1
        %s321 = scalar_select %p320, %s24, 1
        %s322 = smul.addr %s321, 8
        %s323 = scalar_lea.vmem %s0, %s322
        %p324 = pneg %p45
        %p325 = pneg %p42
        %p326 = pneg %p66
        %p327 = pneg %p63
        %p328 = pneg %p87
        %p329 = pneg %p84
        %p330 = pneg %p108
        %p331 = pneg %p105
        %p332 = pneg %p129
        %p333 = pneg %p126
        %p334 = pneg %p150
        %p335 = pneg %p147
        %p336 = pneg %p171
        %p337 = pneg %p168
        %p338 = pneg %p192
        %p339 = pneg %p189
        %p340 = pneg %p213
        %p341 = pneg %p210
        %p342 = pneg %p234
        %p343 = pneg %p231
        %p344 = pneg %p260
        %p345 = pneg %p257
        %s346 = sand.u32 %s247, 1
        %s347 = scalar_lea.sflag [#allocation3], %s346
        %s348 = sand.u32 %s247, 1
        %s349 = smul.addr %s348, 8
        %s350 = scalar_lea.vmem [#allocation2], %s349
        %p351 = scmp.lt.s32.totalorder %s24, 1
        %s352 = scalar_select %p351, %s24, 1
        %s353 = smul.addr %s352, 8
        %s354 = scalar_lea.vmem %s0, %s353
        %v356 = vld [vmem:[%s354] sm:$0xff]
        %v357 = vmul.f32 %v356, %v356
        %vm358 = vcmask 261120
        %v359 = vsel %vm358, %v357, 0.0
        %360 = vadd.xlane.f32.xlu0 %v359
        %v361 = vpop.xlane.xlu0 %360
        %v362 = vrcp.pop 32.0
        %v363 = vmul.f32 %v361, %v362
        %v364 = vadd.f32 %v363, 1e-05
        %v365 = vrsqrt.pop %v364
        %v366 = vmul.f32 %v356, %v365
        %v367 = vld [vmem:[%s5] sm:$0x1]
        %v369 = vlaneseq
        %v370 = vshrl.u32 %v369, 7
        %v371 = vsub.s32 0, %v370
        %v372 = vrot.slane %v367, %v371
        %v374 = vmul.f32 %v366, %v372
        %v375 = vpack.c.bf16 %v374, %v374
        %v376 = vld [vmem:[%s1] sm:$0xf]
        %v377 = vld [vmem:[%s1 + $0x4] sm:$0xf]
        %v378 = vld [vmem:[%s1 + $0x8] sm:$0xf]
        %v379 = vld [vmem:[%s1 + $0xc] sm:$0xf]
        %v384 = vunpack.c.l.b16 %v376
        %v385 = vunpack.c.l.b16 %v377
        %v386 = vunpack.c.l.b16 %v378
        %v387 = vunpack.c.l.b16 %v379
        %v388 = vpack.c.b16 %v385, %v384
        %v389 = vpack.c.b16 %v387, %v386
        %v393 = vsel %vm358, %v375, 0
        %395 = vmatprep.subr.bf16.mxu0 0
        %396 = vmatpush1.bf16.msra.mxu0 %v388
        %397 = vmatprep.subr.bf16.mxu0 0
        %398 = vmatpush1.bf16.msra.mxu0 %v389
        %399 = vmatprep.subr.bf16.mxu0 0
        %400 = vmatpush1.bf16.msra.mxu0 0
        %401 = vmatprep.subr.bf16.mxu0 0
        %402 = vmatpush1.bf16.msra.mxu0 0
        %403 = vmatprep.subr.bf16.mxu0 0
        %404 = vmatpush1.bf16.msra.mxu0 0
        %405 = vmatprep.subr.bf16.mxu0 0
        %406 = vmatpush1.bf16.msra.mxu0 0
        %407 = vmatprep.subr.bf16.mxu0 0
        %408 = vmatpush1.bf16.msra.mxu0 0
        %409 = vmatprep.subr.bf16.mxu0 0
        %410 = vmatpush1.bf16.msra.mxu0 0
        %411 = vmatprep.subr.bf16.mxu0 0
        %412 = vmatpush1.bf16.msra.mxu0 0
        %413 = vmatprep.subr.bf16.mxu0 0
        %414 = vmatpush1.bf16.msra.mxu0 0
        %415 = vmatprep.subr.bf16.mxu0 0
        %416 = vmatpush1.bf16.msra.mxu0 0
        %417 = vmatprep.subr.bf16.mxu0 0
        %418 = vmatpush1.bf16.msra.mxu0 0
        %419 = vmatprep.subr.bf16.mxu0 0
        %420 = vmatpush1.bf16.msra.mxu0 0
        %421 = vmatprep.subr.bf16.mxu0 0
        %422 = vmatpush1.bf16.msra.mxu0 0
        %423 = vmatprep.subr.bf16.mxu0 0
        %424 = vmatpush1.bf16.msra.mxu0 0
        %425 = vmatprep.subr.bf16.mxu0 0
        %426 = vmatpush1.bf16.msra.mxu0 0
        %427 = vmatprep.mubr.bf16.mxu0 0
        %428 = vmatmul.mubr.bf16.gmra.mrb[0].mxu0 %v393
        %v429 = vpop.f32.mrb[0].mxu0
        %v430 = vadd.f32 0.0, %v429
        %v431 = vpop.f32.mrb[0].mxu0
        %v432 = vpop.f32.mrb[0].mxu0
        %v433 = vpop.f32.mrb[0].mxu0
        %434 = vdwg.mxu0
        %v435 = vpack.c.bf16 %v430, %v430
        %v436 = vlaneseq
        %v437 = vshrl.u32 %v436, 7
        %v438 = vlaneseq
        %v439 = vand.u32 %v438, 127
        %vm440 = vcmp.ge.s32.totalorder %v437, %v439
        %v441 = vsel %vm440, 0.0, -1e+30
        %v442 = vld [vmem:[%s3] sm:$0xff]
        %v443 = vld [vmem:[%s4] sm:$0xff]
        %v444 = vunpack.c.l.bf16 %v435
        %v445 = vmul.f32 %v444, %v442
        %447 = vrot.lane.b32.xlu0 %v443, 4
        %v448 = vpop.permute.xlu0 %447
        %v450 = vmul.f32 %v444, %v448
        %452 = vrot.lane.b32.xlu0 %v450, 124
        %v453 = vpop.permute.xlu0 %452
        %v455 = vsub.f32 %v445, %v453
        %457 = vrot.lane.b32.xlu0 %v442, 4
        %v458 = vpop.permute.xlu0 %457
        %v460 = vmul.f32 %v444, %v458
        %v461 = vmul.f32 %v444, %v443
        %463 = vrot.lane.b32.xlu0 %v461, 4
        %v464 = vpop.permute.xlu0 %463
        %v466 = vadd.f32 %v460, %v464
        %vm467 = vcmask 31744
        %v468 = vsel %vm467, %v455, %v466
        %v469 = vpack.c.bf16 %v468, %v468
        %470 = vrot.lane.b32.xlu0 %v442, 32
        %v471 = vpop.permute.xlu0 %470
        %v473 = vmul.f32 %v444, %v471
        %474 = vrot.lane.b32.xlu0 %v443, 36
        %v475 = vpop.permute.xlu0 %474
        %v477 = vmul.f32 %v444, %v475
        %479 = vrot.lane.b32.xlu0 %v477, 124
        %v480 = vpop.permute.xlu0 %479
        %v482 = vsub.f32 %v473, %v480
        %483 = vrot.lane.b32.xlu0 %v442, 36
        %v484 = vpop.permute.xlu0 %483
        %v486 = vmul.f32 %v444, %v484
        %487 = vrot.lane.b32.xlu0 %v443, 32
        %v488 = vpop.permute.xlu0 %487
        %v490 = vmul.f32 %v444, %v488
        %492 = vrot.lane.b32.xlu0 %v490, 4
        %v493 = vpop.permute.xlu0 %492
        %v495 = vadd.f32 %v486, %v493
        %497 = vrot.lane.b32.xlu0 %v482, 96
        %v498 = vpop.permute.xlu0 %497
        %501 = vrot.lane.b32.xlu0 %v495, 96
        %v502 = vpop.permute.xlu0 %501
        %v504 = vsel %vm467, %v498, %v502
        %v505 = vpack.c.bf16 %v504, %v504
        %vm506 = vcmask 64512
        %v508 = vsel %vm506, %v469, 0
        %v511 = vsel %vm506, %v505, 0
        %513 = vmatprep.subr.bf16.mxu0 0
        %514 = vmatpush1.bf16.xpose.msra.mxu0 %v511
        %515 = vmatprep.subr.bf16.mxu0 0
        %516 = vmatpush1.bf16.xpose.msra.mxu0 0
        %517 = vmatprep.subr.bf16.mxu0 0
        %518 = vmatpush1.bf16.xpose.msra.mxu0 0
        %519 = vmatprep.subr.bf16.mxu0 0
        %520 = vmatpush1.bf16.xpose.msra.mxu0 0
        %521 = vmatprep.subr.bf16.mxu0 0
        %522 = vmatpush1.bf16.xpose.msra.mxu0 0
        %523 = vmatprep.subr.bf16.mxu0 0
        %524 = vmatpush1.bf16.xpose.msra.mxu0 0
        %525 = vmatprep.subr.bf16.mxu0 0
        %526 = vmatpush1.bf16.xpose.msra.mxu0 0
        %527 = vmatprep.subr.bf16.mxu0 0
        %528 = vmatpush1.bf16.xpose.msra.mxu0 0
        %529 = vmatprep.subr.bf16.mxu0 0
        %530 = vmatpush1.bf16.xpose.msra.mxu0 0
        %531 = vmatprep.subr.bf16.mxu0 0
        %532 = vmatpush1.bf16.xpose.msra.mxu0 0
        %533 = vmatprep.subr.bf16.mxu0 0
        %534 = vmatpush1.bf16.xpose.msra.mxu0 0
        %535 = vmatprep.subr.bf16.mxu0 0
        %536 = vmatpush1.bf16.xpose.msra.mxu0 0
        %537 = vmatprep.subr.bf16.mxu0 0
        %538 = vmatpush1.bf16.xpose.msra.mxu0 0
        %539 = vmatprep.subr.bf16.mxu0 0
        %540 = vmatpush1.bf16.xpose.msra.mxu0 0
        %541 = vmatprep.subr.bf16.mxu0 0
        %542 = vmatpush1.bf16.xpose.msra.mxu0 0
        %543 = vmatprep.subr.bf16.mxu0 0
        %544 = vmatpush1.bf16.xpose.msra.mxu0 0
        %545 = vmatprep.mubr.bf16.mxu0 0
        %546 = vmatmul.mubr.bf16.gmra.mrb[0].mxu0 %v508
        %v547 = vpop.f32.mrb[0].mxu0
        %v548 = vadd.f32 %v441, %v547
        %v549 = vpop.f32.mrb[0].mxu0
        %v550 = vpop.f32.mrb[0].mxu0
        %v551 = vpop.f32.mrb[0].mxu0
        %552 = vdwg.mxu0
        %v553 = vsel %vm506, %v548, -inf
        %554 = vmax.xlane.f32.xlu0 %v553
        %v555 = vpop.xlane.xlu0 %554
        %v556 = vsub.f32 %v548, %v555
        %v557 = vmul.f32 %v556, 1.442695
        %v558 = vpow.pop %v557
        %v559 = vsel %vm506, %v558, 0.0
        %560 = vadd.xlane.f32.xlu0 %v559
        %v561 = vpop.xlane.xlu0 %560
        %v562 = vrcp.pop %v561
        %v563 = vpack.c.bf16 %v558, %v558
        %565 = vrot.lane.b32.xlu0 %v435, 64
        %v566 = vpop.permute.xlu0 %565
        %v568 = vsel %vm506, %v563, 0
        %vm570 = vcmask 1043456
        %v572 = vsel %vm570, %v566, 0
        %574 = vmatprep.subr.bf16.mxu0 0
        %575 = vmatpush1.bf16.msra.mxu0 %v572
        %576 = vmatprep.subr.bf16.mxu0 0
        %577 = vmatpush1.bf16.msra.mxu0 0
        %578 = vmatprep.subr.bf16.mxu0 0
        %579 = vmatpush1.bf16.msra.mxu0 0
        %580 = vmatprep.subr.bf16.mxu0 0
        %581 = vmatpush1.bf16.msra.mxu0 0
        %582 = vmatprep.subr.bf16.mxu0 0
        %583 = vmatpush1.bf16.msra.mxu0 0
        %584 = vmatprep.subr.bf16.mxu0 0
        %585 = vmatpush1.bf16.msra.mxu0 0
        %586 = vmatprep.subr.bf16.mxu0 0
        %587 = vmatpush1.bf16.msra.mxu0 0
        %588 = vmatprep.subr.bf16.mxu0 0
        %589 = vmatpush1.bf16.msra.mxu0 0
        %590 = vmatprep.subr.bf16.mxu0 0
        %591 = vmatpush1.bf16.msra.mxu0 0
        %592 = vmatprep.subr.bf16.mxu0 0
        %593 = vmatpush1.bf16.msra.mxu0 0
        %594 = vmatprep.subr.bf16.mxu0 0
        %595 = vmatpush1.bf16.msra.mxu0 0
        %596 = vmatprep.subr.bf16.mxu0 0
        %597 = vmatpush1.bf16.msra.mxu0 0
        %598 = vmatprep.subr.bf16.mxu0 0
        %599 = vmatpush1.bf16.msra.mxu0 0
        %600 = vmatprep.subr.bf16.mxu0 0
        %601 = vmatpush1.bf16.msra.mxu0 0
        %602 = vmatprep.subr.bf16.mxu0 0
        %603 = vmatpush1.bf16.msra.mxu0 0
        %604 = vmatprep.subr.bf16.mxu0 0
        %605 = vmatpush1.bf16.msra.mxu0 0
        %606 = vmatprep.mubr.bf16.mxu0 0
        %607 = vmatmul.mubr.bf16.gmra.mrb[0].mxu0 %v568
        %v608 = vpop.f32.mrb[0].mxu0
        %v609 = vadd.f32 0.0, %v608
        %v610 = vpop.f32.mrb[0].mxu0
        %v611 = vpop.f32.mrb[0].mxu0
        %v612 = vpop.f32.mrb[0].mxu0
        %613 = vdwg.mxu0
        %v614 = vmul.f32 %v609, %v562
        %v615 = vpack.c.bf16 %v614, %v614
        %v616 = vld [vmem:[%s2] sm:$0xf]
        %617 = vrot.lane.b32.xlu0 %v442, 8
        %v618 = vpop.permute.xlu0 %617
        %v620 = vmul.f32 %v444, %v618
        %621 = vrot.lane.b32.xlu0 %v443, 12
        %v622 = vpop.permute.xlu0 %621
        %v624 = vmul.f32 %v444, %v622
        %626 = vrot.lane.b32.xlu0 %v624, 124
        %v627 = vpop.permute.xlu0 %626
        %v629 = vsub.f32 %v620, %v627
        %630 = vrot.lane.b32.xlu0 %v442, 12
        %v631 = vpop.permute.xlu0 %630
        %v633 = vmul.f32 %v444, %v631
        %634 = vrot.lane.b32.xlu0 %v443, 8
        %v635 = vpop.permute.xlu0 %634
        %v637 = vmul.f32 %v444, %v635
        %639 = vrot.lane.b32.xlu0 %v637, 4
        %v640 = vpop.permute.xlu0 %639
        %v642 = vadd.f32 %v633, %v640
        %644 = vrot.lane.b32.xlu0 %v629, 120
        %v645 = vpop.permute.xlu0 %644
        %648 = vrot.lane.b32.xlu0 %v642, 120
        %v649 = vpop.permute.xlu0 %648
        %v651 = vsel %vm467, %v645, %v649
        %v652 = vpack.c.bf16 %v651, %v651
        %653 = vrot.lane.b32.xlu0 %v442, 40
        %v654 = vpop.permute.xlu0 %653
        %v656 = vmul.f32 %v444, %v654
        %657 = vrot.lane.b32.xlu0 %v443, 44
        %v658 = vpop.permute.xlu0 %657
        %v660 = vmul.f32 %v444, %v658
        %662 = vrot.lane.b32.xlu0 %v660, 124
        %v663 = vpop.permute.xlu0 %662
        %v665 = vsub.f32 %v656, %v663
        %666 = vrot.lane.b32.xlu0 %v442, 44
        %v667 = vpop.permute.xlu0 %666
        %v669 = vmul.f32 %v444, %v667
        %670 = vrot.lane.b32.xlu0 %v443, 40
        %v671 = vpop.permute.xlu0 %670
        %v673 = vmul.f32 %v444, %v671
        %675 = vrot.lane.b32.xlu0 %v673, 4
        %v676 = vpop.permute.xlu0 %675
        %v678 = vadd.f32 %v669, %v676
        %680 = vrot.lane.b32.xlu0 %v665, 88
        %v681 = vpop.permute.xlu0 %680
        %684 = vrot.lane.b32.xlu0 %v678, 88
        %v685 = vpop.permute.xlu0 %684
        %v687 = vsel %vm467, %v681, %v685
        %v688 = vpack.c.bf16 %v687, %v687
        %v690 = vsel %vm506, %v652, 0
        %v693 = vsel %vm506, %v688, 0
        %695 = vmatprep.subr.bf16.mxu0 0
        %696 = vmatpush1.bf16.xpose.msra.mxu0 %v693
        %697 = vmatprep.subr.bf16.mxu0 0
        %698 = vmatpush1.bf16.xpose.msra.mxu0 0
        %699 = vmatprep.subr.bf16.mxu0 0
        %700 = vmatpush1.bf16.xpose.msra.mxu0 0
        %701 = vmatprep.subr.bf16.mxu0 0
        %702 = vmatpush1.bf16.xpose.msra.mxu0 0
        %703 = vmatprep.subr.bf16.mxu0 0
        %704 = vmatpush1.bf16.xpose.msra.mxu0 0
        %705 = vmatprep.subr.bf16.mxu0 0
        %706 = vmatpush1.bf16.xpose.msra.mxu0 0
        %707 = vmatprep.subr.bf16.mxu0 0
        %708 = vmatpush1.bf16.xpose.msra.mxu0 0
        %709 = vmatprep.subr.bf16.mxu0 0
        %710 = vmatpush1.bf16.xpose.msra.mxu0 0
        %711 = vmatprep.subr.bf16.mxu0 0
        %712 = vmatpush1.bf16.xpose.msra.mxu0 0
        %713 = vmatprep.subr.bf16.mxu0 0
        %714 = vmatpush1.bf16.xpose.msra.mxu0 0
        %715 = vmatprep.subr.bf16.mxu0 0
        %716 = vmatpush1.bf16.xpose.msra.mxu0 0
        %717 = vmatprep.subr.bf16.mxu0 0
        %718 = vmatpush1.bf16.xpose.msra.mxu0 0
        %719 = vmatprep.subr.bf16.mxu0 0
        %720 = vmatpush1.bf16.xpose.msra.mxu0 0
        %721 = vmatprep.subr.bf16.mxu0 0
        %722 = vmatpush1.bf16.xpose.msra.mxu0 0
        %723 = vmatprep.subr.bf16.mxu0 0
        %724 = vmatpush1.bf16.xpose.msra.mxu0 0
        %725 = vmatprep.subr.bf16.mxu0 0
        %726 = vmatpush1.bf16.xpose.msra.mxu0 0
        %727 = vmatprep.mubr.bf16.mxu0 0
        %728 = vmatmul.mubr.bf16.gmra.mrb[0].mxu0 %v690
        %v729 = vpop.f32.mrb[0].mxu0
        %v730 = vadd.f32 %v441, %v729
        %v731 = vpop.f32.mrb[0].mxu0
        %v732 = vpop.f32.mrb[0].mxu0
        %v733 = vpop.f32.mrb[0].mxu0
        %734 = vdwg.mxu0
        %v735 = vsel %vm506, %v730, -inf
        %736 = vmax.xlane.f32.xlu0 %v735
        %v737 = vpop.xlane.xlu0 %736
        %v738 = vsub.f32 %v730, %v737
        %v739 = vmul.f32 %v738, 1.442695
        %v740 = vpow.pop %v739
        %v741 = vsel %vm506, %v740, 0.0
        %742 = vadd.xlane.f32.xlu0 %v741
        %v743 = vpop.xlane.xlu0 %742
        %v744 = vrcp.pop %v743
        %v745 = vpack.c.bf16 %v740, %v740
        %746 = vrot.lane.b32.xlu0 %v435, 56
        %v747 = vpop.permute.xlu0 %746
        %v749 = vsel %vm506, %v745, 0
        %v752 = vsel %vm570, %v747, 0
        %754 = vmatprep.subr.bf16.mxu0 0
        %755 = vmatpush1.bf16.msra.mxu0 %v752
        %756 = vmatprep.subr.bf16.mxu0 0
        %757 = vmatpush1.bf16.msra.mxu0 0
        %758 = vmatprep.subr.bf16.mxu0 0
        %759 = vmatpush1.bf16.msra.mxu0 0
        %760 = vmatprep.subr.bf16.mxu0 0
        %761 = vmatpush1.bf16.msra.mxu0 0
        %762 = vmatprep.subr.bf16.mxu0 0
        %763 = vmatpush1.bf16.msra.mxu0 0
        %764 = vmatprep.subr.bf16.mxu0 0
        %765 = vmatpush1.bf16.msra.mxu0 0
        %766 = vmatprep.subr.bf16.mxu0 0
        %767 = vmatpush1.bf16.msra.mxu0 0
        %768 = vmatprep.subr.bf16.mxu0 0
        %769 = vmatpush1.bf16.msra.mxu0 0
        %770 = vmatprep.subr.bf16.mxu0 0
        %771 = vmatpush1.bf16.msra.mxu0 0
        %772 = vmatprep.subr.bf16.mxu0 0
        %773 = vmatpush1.bf16.msra.mxu0 0
        %774 = vmatprep.subr.bf16.mxu0 0
        %775 = vmatpush1.bf16.msra.mxu0 0
        %776 = vmatprep.subr.bf16.mxu0 0
        %777 = vmatpush1.bf16.msra.mxu0 0
        %778 = vmatprep.subr.bf16.mxu0 0
        %779 = vmatpush1.bf16.msra.mxu0 0
        %780 = vmatprep.subr.bf16.mxu0 0
        %781 = vmatpush1.bf16.msra.mxu0 0
        %782 = vmatprep.subr.bf16.mxu0 0
        %783 = vmatpush1.bf16.msra.mxu0 0
        %784 = vmatprep.subr.bf16.mxu0 0
        %785 = vmatpush1.bf16.msra.mxu0 0
        %786 = vmatprep.mubr.bf16.mxu0 0
        %787 = vmatmul.mubr.bf16.gmra.mrb[0].mxu0 %v749
        %v788 = vpop.f32.mrb[0].mxu0
        %v789 = vadd.f32 0.0, %v788
        %v790 = vpop.f32.mrb[0].mxu0
        %v791 = vpop.f32.mrb[0].mxu0
        %v792 = vpop.f32.mrb[0].mxu0
        %793 = vdwg.mxu0
        %v794 = vmul.f32 %v789, %v744
        %v795 = vpack.c.bf16 %v794, %v794
        %v796 = vld [vmem:[%s2 + $0x4] sm:$0xf]
        %v798 = vsel %vm506, %v795, 0
        %v801 = vsel %vm570, %v796, 0
        %803 = vmatprep.subr.bf16.mxu0 0
        %804 = vmatpush1.bf16.msra.mxu0 %v801
        %805 = vmatprep.subr.bf16.mxu0 0
        %806 = vmatpush1.bf16.msra.mxu0 0
        %807 = vmatprep.subr.bf16.mxu0 0
        %808 = vmatpush1.bf16.msra.mxu0 0
        %809 = vmatprep.subr.bf16.mxu0 0
        %810 = vmatpush1.bf16.msra.mxu0 0
        %811 = vmatprep.subr.bf16.mxu0 0
        %812 = vmatpush1.bf16.msra.mxu0 0
        %813 = vmatprep.subr.bf16.mxu0 0
        %814 = vmatpush1.bf16.msra.mxu0 0
        %815 = vmatprep.subr.bf16.mxu0 0
        %816 = vmatpush1.bf16.msra.mxu0 0
        %817 = vmatprep.subr.bf16.mxu0 0
        %818 = vmatpush1.bf16.msra.mxu0 0
        %819 = vmatprep.subr.bf16.mxu0 0
        %820 = vmatpush1.bf16.msra.mxu0 0
        %821 = vmatprep.subr.bf16.mxu0 0
        %822 = vmatpush1.bf16.msra.mxu0 0
        %823 = vmatprep.subr.bf16.mxu0 0
        %824 = vmatpush1.bf16.msra.mxu0 0
        %825 = vmatprep.subr.bf16.mxu0 0
        %826 = vmatpush1.bf16.msra.mxu0 0
        %827 = vmatprep.subr.bf16.mxu0 0
        %828 = vmatpush1.bf16.msra.mxu0 0
        %829 = vmatprep.subr.bf16.mxu0 0
        %830 = vmatpush1.bf16.msra.mxu0 0
        %831 = vmatprep.subr.bf16.mxu0 0
        %832 = vmatpush1.bf16.msra.mxu0 0
        %833 = vmatprep.subr.bf16.mxu0 0
        %834 = vmatpush1.bf16.msra.mxu0 0
        %835 = vmatprep.mubr.bf16.mxu0 0
        %836 = vmatmul.mubr.bf16.gmra.mrb[0].mxu0 %v798
        %v837 = vpop.f32.mrb[0].mxu0
        %v838 = vadd.f32 0.0, %v837
        %v839 = vpop.f32.mrb[0].mxu0
        %v840 = vpop.f32.mrb[0].mxu0
        %v841 = vpop.f32.mrb[0].mxu0
        %842 = vdwg.mxu0
        %v844 = vsel %vm506, %v615, 0
        %v847 = vsel %vm570, %v616, 0
        %849 = vmatprep.subr.bf16.mxu0 0
        %850 = vmatpush1.bf16.msra.mxu0 %v847
        %851 = vmatprep.subr.bf16.mxu0 0
        %852 = vmatpush1.bf16.msra.mxu0 0
        %853 = vmatprep.subr.bf16.mxu0 0
        %854 = vmatpush1.bf16.msra.mxu0 0
        %855 = vmatprep.subr.bf16.mxu0 0
        %856 = vmatpush1.bf16.msra.mxu0 0
        %857 = vmatprep.subr.bf16.mxu0 0
        %858 = vmatpush1.bf16.msra.mxu0 0
        %859 = vmatprep.subr.bf16.mxu0 0
        %860 = vmatpush1.bf16.msra.mxu0 0
        %861 = vmatprep.subr.bf16.mxu0 0
        %862 = vmatpush1.bf16.msra.mxu0 0
        %863 = vmatprep.subr.bf16.mxu0 0
        %864 = vmatpush1.bf16.msra.mxu0 0
        %865 = vmatprep.subr.bf16.mxu0 0
        %866 = vmatpush1.bf16.msra.mxu0 0
        %867 = vmatprep.subr.bf16.mxu0 0
        %868 = vmatpush1.bf16.msra.mxu0 0
        %869 = vmatprep.subr.bf16.mxu0 0
        %870 = vmatpush1.bf16.msra.mxu0 0
        %871 = vmatprep.subr.bf16.mxu0 0
        %872 = vmatpush1.bf16.msra.mxu0 0
        %873 = vmatprep.subr.bf16.mxu0 0
        %874 = vmatpush1.bf16.msra.mxu0 0
        %875 = vmatprep.subr.bf16.mxu0 0
        %876 = vmatpush1.bf16.msra.mxu0 0
        %877 = vmatprep.subr.bf16.mxu0 0
        %878 = vmatpush1.bf16.msra.mxu0 0
        %879 = vmatprep.subr.bf16.mxu0 0
        %880 = vmatpush1.bf16.msra.mxu0 0
        %881 = vmatprep.mubr.bf16.mxu0 0
        %882 = vmatmul.mubr.bf16.gmra.mrb[0].mxu0 %v844
        %v883 = vpop.f32.mrb[0].mxu0
        %v884 = vadd.f32 %v838, %v883
        %v885 = vpop.f32.mrb[0].mxu0
        %v886 = vpop.f32.mrb[0].mxu0
        %v887 = vpop.f32.mrb[0].mxu0
        %888 = vdwg.mxu0
        %889 = vrot.lane.b32.xlu0 %v442, 16
        %v890 = vpop.permute.xlu0 %889
        %v892 = vmul.f32 %v444, %v890
        %893 = vrot.lane.b32.xlu0 %v443, 20
        %v894 = vpop.permute.xlu0 %893
        %v896 = vmul.f32 %v444, %v894
        %898 = vrot.lane.b32.xlu0 %v896, 124
        %v899 = vpop.permute.xlu0 %898
        %v901 = vsub.f32 %v892, %v899
        %902 = vrot.lane.b32.xlu0 %v442, 20
        %v903 = vpop.permute.xlu0 %902
        %v905 = vmul.f32 %v444, %v903
        %906 = vrot.lane.b32.xlu0 %v443, 16
        %v907 = vpop.permute.xlu0 %906
        %v909 = vmul.f32 %v444, %v907
        %911 = vrot.lane.b32.xlu0 %v909, 4
        %v912 = vpop.permute.xlu0 %911
        %v914 = vadd.f32 %v905, %v912
        %916 = vrot.lane.b32.xlu0 %v901, 112
        %v917 = vpop.permute.xlu0 %916
        %920 = vrot.lane.b32.xlu0 %v914, 112
        %v921 = vpop.permute.xlu0 %920
        %v923 = vsel %vm467, %v917, %v921
        %v924 = vpack.c.bf16 %v923, %v923
        %925 = vrot.lane.b32.xlu0 %v442, 48
        %v926 = vpop.permute.xlu0 %925
        %v928 = vmul.f32 %v444, %v926
        %929 = vrot.lane.b32.xlu0 %v443, 52
        %v930 = vpop.permute.xlu0 %929
        %v932 = vmul.f32 %v444, %v930
        %934 = vrot.lane.b32.xlu0 %v932, 124
        %v935 = vpop.permute.xlu0 %934
        %v937 = vsub.f32 %v928, %v935
        %938 = vrot.lane.b32.xlu0 %v442, 52
        %v939 = vpop.permute.xlu0 %938
        %v941 = vmul.f32 %v444, %v939
        %942 = vrot.lane.b32.xlu0 %v443, 48
        %v943 = vpop.permute.xlu0 %942
        %v945 = vmul.f32 %v444, %v943
        %947 = vrot.lane.b32.xlu0 %v945, 4
        %v948 = vpop.permute.xlu0 %947
        %v950 = vadd.f32 %v941, %v948
        %952 = vrot.lane.b32.xlu0 %v937, 80
        %v953 = vpop.permute.xlu0 %952
        %956 = vrot.lane.b32.xlu0 %v950, 80
        %v957 = vpop.permute.xlu0 %956
        %v959 = vsel %vm467, %v953, %v957
        %v960 = vpack.c.bf16 %v959, %v959
        %v962 = vsel %vm506, %v924, 0
        %v965 = vsel %vm506, %v960, 0
        %967 = vmatprep.subr.bf16.mxu0 0
        %968 = vmatpush1.bf16.xpose.msra.mxu0 %v965
        %969 = vmatprep.subr.bf16.mxu0 0
        %970 = vmatpush1.bf16.xpose.msra.mxu0 0
        %971 = vmatprep.subr.bf16.mxu0 0
        %972 = vmatpush1.bf16.xpose.msra.mxu0 0
        %973 = vmatprep.subr.bf16.mxu0 0
        %974 = vmatpush1.bf16.xpose.msra.mxu0 0
        %975 = vmatprep.subr.bf16.mxu0 0
        %976 = vmatpush1.bf16.xpose.msra.mxu0 0
        %977 = vmatprep.subr.bf16.mxu0 0
        %978 = vmatpush1.bf16.xpose.msra.mxu0 0
        %979 = vmatprep.subr.bf16.mxu0 0
        %980 = vmatpush1.bf16.xpose.msra.mxu0 0
        %981 = vmatprep.subr.bf16.mxu0 0
        %982 = vmatpush1.bf16.xpose.msra.mxu0 0
        %983 = vmatprep.subr.bf16.mxu0 0
        %984 = vmatpush1.bf16.xpose.msra.mxu0 0
        %985 = vmatprep.subr.bf16.mxu0 0
        %986 = vmatpush1.bf16.xpose.msra.mxu0 0
        %987 = vmatprep.subr.bf16.mxu0 0
        %988 = vmatpush1.bf16.xpose.msra.mxu0 0
        %989 = vmatprep.subr.bf16.mxu0 0
        %990 = vmatpush1.bf16.xpose.msra.mxu0 0
        %991 = vmatprep.subr.bf16.mxu0 0
        %992 = vmatpush1.bf16.xpose.msra.mxu0 0
        %993 = vmatprep.subr.bf16.mxu0 0
        %994 = vmatpush1.bf16.xpose.msra.mxu0 0
        %995 = vmatprep.subr.bf16.mxu0 0
        %996 = vmatpush1.bf16.xpose.msra.mxu0 0
        %997 = vmatprep.subr.bf16.mxu0 0
        %998 = vmatpush1.bf16.xpose.msra.mxu0 0
        %999 = vmatprep.mubr.bf16.mxu0 0
        %1000 = vmatmul.mubr.bf16.gmra.mrb[0].mxu0 %v962
        %v1001 = vpop.f32.mrb[0].mxu0
        %v1002 = vadd.f32 %v441, %v1001
        %v1003 = vpop.f32.mrb[0].mxu0
        %v1004 = vpop.f32.mrb[0].mxu0
        %v1005 = vpop.f32.mrb[0].mxu0
        %1006 = vdwg.mxu0
        %v1007 = vsel %vm506, %v1002, -inf
        %1008 = vmax.xlane.f32.xlu0 %v1007
        %v1009 = vpop.xlane.xlu0 %1008
        %v1010 = vsub.f32 %v1002, %v1009
        %v1011 = vmul.f32 %v1010, 1.442695
        %v1012 = vpow.pop %v1011
        %v1013 = vsel %vm506, %v1012, 0.0
        %1014 = vadd.xlane.f32.xlu0 %v1013
        %v1015 = vpop.xlane.xlu0 %1014
        %v1016 = vrcp.pop %v1015
        %v1017 = vpack.c.bf16 %v1012, %v1012
        %1018 = vrot.lane.b32.xlu0 %v435, 48
        %v1019 = vpop.permute.xlu0 %1018
        %v1021 = vsel %vm506, %v1017, 0
        %v1024 = vsel %vm570, %v1019, 0
        %1026 = vmatprep.subr.bf16.mxu0 0
        %1027 = vmatpush1.bf16.msra.mxu0 %v1024
        %1028 = vmatprep.subr.bf16.mxu0 0
        %1029 = vmatpush1.bf16.msra.mxu0 0
        %1030 = vmatprep.subr.bf16.mxu0 0
        %1031 = vmatpush1.bf16.msra.mxu0 0
        %1032 = vmatprep.subr.bf16.mxu0 0
        %1033 = vmatpush1.bf16.msra.mxu0 0
        %1034 = vmatprep.subr.bf16.mxu0 0
        %1035 = vmatpush1.bf16.msra.mxu0 0
        %1036 = vmatprep.subr.bf16.mxu0 0
        %1037 = vmatpush1.bf16.msra.mxu0 0
        %1038 = vmatprep.subr.bf16.mxu0 0
        %1039 = vmatpush1.bf16.msra.mxu0 0
        %1040 = vmatprep.subr.bf16.mxu0 0
        %1041 = vmatpush1.bf16.msra.mxu0 0
        %1042 = vmatprep.subr.bf16.mxu0 0
        %1043 = vmatpush1.bf16.msra.mxu0 0
        %1044 = vmatprep.subr.bf16.mxu0 0
        %1045 = vmatpush1.bf16.msra.mxu0 0
        %1046 = vmatprep.subr.bf16.mxu0 0
        %1047 = vmatpush1.bf16.msra.mxu0 0
        %1048 = vmatprep.subr.bf16.mxu0 0
        %1049 = vmatpush1.bf16.msra.mxu0 0
        %1050 = vmatprep.subr.bf16.mxu0 0
        %1051 = vmatpush1.bf16.msra.mxu0 0
        %1052 = vmatprep.subr.bf16.mxu0 0
        %1053 = vmatpush1.bf16.msra.mxu0 0
        %1054 = vmatprep.subr.bf16.mxu0 0
        %1055 = vmatpush1.bf16.msra.mxu0 0
        %1056 = vmatprep.subr.bf16.mxu0 0
        %1057 = vmatpush1.bf16.msra.mxu0 0
        %1058 = vmatprep.mubr.bf16.mxu0 0
        %1059 = vmatmul.mubr.bf16.gmra.mrb[0].mxu0 %v1021
        %v1060 = vpop.f32.mrb[0].mxu0
        %v1061 = vadd.f32 0.0, %v1060
        %v1062 = vpop.f32.mrb[0].mxu0
        %v1063 = vpop.f32.mrb[0].mxu0
        %v1064 = vpop.f32.mrb[0].mxu0
        %1065 = vdwg.mxu0
        %v1066 = vmul.f32 %v1061, %v1016
        %v1067 = vpack.c.bf16 %v1066, %v1066
        %v1068 = vld [vmem:[%s2 + $0x8] sm:$0xf]
        %v1070 = vsel %vm506, %v1067, 0
        %v1073 = vsel %vm570, %v1068, 0
        %1075 = vmatprep.subr.bf16.mxu0 0
        %1076 = vmatpush1.bf16.msra.mxu0 %v1073
        %1077 = vmatprep.subr.bf16.mxu0 0
        %1078 = vmatpush1.bf16.msra.mxu0 0
        %1079 = vmatprep.subr.bf16.mxu0 0
        %1080 = vmatpush1.bf16.msra.mxu0 0
        %1081 = vmatprep.subr.bf16.mxu0 0
        %1082 = vmatpush1.bf16.msra.mxu0 0
        %1083 = vmatprep.subr.bf16.mxu0 0
        %1084 = vmatpush1.bf16.msra.mxu0 0
        %1085 = vmatprep.subr.bf16.mxu0 0
        %1086 = vmatpush1.bf16.msra.mxu0 0
        %1087 = vmatprep.subr.bf16.mxu0 0
        %1088 = vmatpush1.bf16.msra.mxu0 0
        %1089 = vmatprep.subr.bf16.mxu0 0
        %1090 = vmatpush1.bf16.msra.mxu0 0
        %1091 = vmatprep.subr.bf16.mxu0 0
        %1092 = vmatpush1.bf16.msra.mxu0 0
        %1093 = vmatprep.subr.bf16.mxu0 0
        %1094 = vmatpush1.bf16.msra.mxu0 0
        %1095 = vmatprep.subr.bf16.mxu0 0
        %1096 = vmatpush1.bf16.msra.mxu0 0
        %1097 = vmatprep.subr.bf16.mxu0 0
        %1098 = vmatpush1.bf16.msra.mxu0 0
        %1099 = vmatprep.subr.bf16.mxu0 0
        %1100 = vmatpush1.bf16.msra.mxu0 0
        %1101 = vmatprep.subr.bf16.mxu0 0
        %1102 = vmatpush1.bf16.msra.mxu0 0
        %1103 = vmatprep.subr.bf16.mxu0 0
        %1104 = vmatpush1.bf16.msra.mxu0 0
        %1105 = vmatprep.subr.bf16.mxu0 0
        %1106 = vmatpush1.bf16.msra.mxu0 0
        %1107 = vmatprep.mubr.bf16.mxu0 0
        %1108 = vmatmul.mubr.bf16.gmra.mrb[0].mxu0 %v1070
        %v1109 = vpop.f32.mrb[0].mxu0
        %v1110 = vadd.f32 0.0, %v1109
        %v1111 = vpop.f32.mrb[0].mxu0
        %v1112 = vpop.f32.mrb[0].mxu0
        %v1113 = vpop.f32.mrb[0].mxu0
        %1114 = vdwg.mxu0
        %v1115 = vadd.f32 %v884, %v1110
        %1116 = vrot.lane.b32.xlu0 %v442, 24
        %v1117 = vpop.permute.xlu0 %1116
        %v1119 = vmul.f32 %v444, %v1117
        %1120 = vrot.lane.b32.xlu0 %v443, 28
        %v1121 = vpop.permute.xlu0 %1120
        %v1123 = vmul.f32 %v444, %v1121
        %1125 = vrot.lane.b32.xlu0 %v1123, 124
        %v1126 = vpop.permute.xlu0 %1125
        %v1128 = vsub.f32 %v1119, %v1126
        %1129 = vrot.lane.b32.xlu0 %v442, 28
        %v1130 = vpop.permute.xlu0 %1129
        %v1132 = vmul.f32 %v444, %v1130
        %1133 = vrot.lane.b32.xlu0 %v443, 24
        %v1134 = vpop.permute.xlu0 %1133
        %v1136 = vmul.f32 %v444, %v1134
        %1138 = vrot.lane.b32.xlu0 %v1136, 4
        %v1139 = vpop.permute.xlu0 %1138
        %v1141 = vadd.f32 %v1132, %v1139
        %1143 = vrot.lane.b32.xlu0 %v1128, 104
        %v1144 = vpop.permute.xlu0 %1143
        %1147 = vrot.lane.b32.xlu0 %v1141, 104
        %v1148 = vpop.permute.xlu0 %1147
        %v1150 = vsel %vm467, %v1144, %v1148
        %v1151 = vpack.c.bf16 %v1150, %v1150
        %1152 = vrot.lane.b32.xlu0 %v442, 56
        %v1153 = vpop.permute.xlu0 %1152
        %v1155 = vmul.f32 %v444, %v1153
        %1156 = vrot.lane.b32.xlu0 %v443, 60
        %v1157 = vpop.permute.xlu0 %1156
        %v1159 = vmul.f32 %v444, %v1157
        %1161 = vrot.lane.b32.xlu0 %v1159, 124
        %v1162 = vpop.permute.xlu0 %1161
        %v1164 = vsub.f32 %v1155, %v1162
        %1165 = vrot.lane.b32.xlu0 %v442, 60
        %v1166 = vpop.permute.xlu0 %1165
        %v1168 = vmul.f32 %v444, %v1166
        %1169 = vrot.lane.b32.xlu0 %v443, 56
        %v1170 = vpop.permute.xlu0 %1169
        %v1172 = vmul.f32 %v444, %v1170
        %1174 = vrot.lane.b32.xlu0 %v1172, 4
        %v1175 = vpop.permute.xlu0 %1174
        %v1177 = vadd.f32 %v1168, %v1175
        %1179 = vrot.lane.b32.xlu0 %v1164, 72
        %v1180 = vpop.permute.xlu0 %1179
        %1183 = vrot.lane.b32.xlu0 %v1177, 72
        %v1184 = vpop.permute.xlu0 %1183
        %v1186 = vsel %vm467, %v1180, %v1184
        %v1187 = vpack.c.bf16 %v1186, %v1186
        %v1189 = vsel %vm506, %v1151, 0
        %v1192 = vsel %vm506, %v1187, 0
        %1194 = vmatprep.subr.bf16.mxu0 0
        %1195 = vmatpush1.bf16.xpose.msra.mxu0 %v1192
        %1196 = vmatprep.subr.bf16.mxu0 0
        %1197 = vmatpush1.bf16.xpose.msra.mxu0 0
        %1198 = vmatprep.subr.bf16.mxu0 0
        %1199 = vmatpush1.bf16.xpose.msra.mxu0 0
        %1200 = vmatprep.subr.bf16.mxu0 0
        %1201 = vmatpush1.bf16.xpose.msra.mxu0 0
        %1202 = vmatprep.subr.bf16.mxu0 0
        %1203 = vmatpush1.bf16.xpose.msra.mxu0 0
        %1204 = vmatprep.subr.bf16.mxu0 0
        %1205 = vmatpush1.bf16.xpose.msra.mxu0 0
        %1206 = vmatprep.subr.bf16.mxu0 0
        %1207 = vmatpush1.bf16.xpose.msra.mxu0 0
        %1208 = vmatprep.subr.bf16.mxu0 0
        %1209 = vmatpush1.bf16.xpose.msra.mxu0 0
        %1210 = vmatprep.subr.bf16.mxu0 0
        %1211 = vmatpush1.bf16.xpose.msra.mxu0 0
        %1212 = vmatprep.subr.bf16.mxu0 0
        %1213 = vmatpush1.bf16.xpose.msra.mxu0 0
        %1214 = vmatprep.subr.bf16.mxu0 0
        %1215 = vmatpush1.bf16.xpose.msra.mxu0 0
        %1216 = vmatprep.subr.bf16.mxu0 0
        %1217 = vmatpush1.bf16.xpose.msra.mxu0 0
        %1218 = vmatprep.subr.bf16.mxu0 0
        %1219 = vmatpush1.bf16.xpose.msra.mxu0 0
        %1220 = vmatprep.subr.bf16.mxu0 0
        %1221 = vmatpush1.bf16.xpose.msra.mxu0 0
        %1222 = vmatprep.subr.bf16.mxu0 0
        %1223 = vmatpush1.bf16.xpose.msra.mxu0 0
        %1224 = vmatprep.subr.bf16.mxu0 0
        %1225 = vmatpush1.bf16.xpose.msra.mxu0 0
        %1226 = vmatprep.mubr.bf16.mxu0 0
        %1227 = vmatmul.mubr.bf16.gmra.mrb[0].mxu0 %v1189
        %v1228 = vpop.f32.mrb[0].mxu0
        %v1229 = vadd.f32 %v441, %v1228
        %v1230 = vpop.f32.mrb[0].mxu0
        %v1231 = vpop.f32.mrb[0].mxu0
        %v1232 = vpop.f32.mrb[0].mxu0
        %1233 = vdwg.mxu0
        %v1234 = vsel %vm506, %v1229, -inf
        %1235 = vmax.xlane.f32.xlu0 %v1234
        %v1236 = vpop.xlane.xlu0 %1235
        %v1237 = vsub.f32 %v1229, %v1236
        %v1238 = vmul.f32 %v1237, 1.442695
        %v1239 = vpow.pop %v1238
        %v1240 = vsel %vm506, %v1239, 0.0
        %1241 = vadd.xlane.f32.xlu0 %v1240
        %v1242 = vpop.xlane.xlu0 %1241
        %v1243 = vrcp.pop %v1242
        %v1244 = vpack.c.bf16 %v1239, %v1239
        %1245 = vrot.lane.b32.xlu0 %v435, 40
        %v1246 = vpop.permute.xlu0 %1245
        %v1248 = vsel %vm506, %v1244, 0
        %v1251 = vsel %vm570, %v1246, 0
        %1253 = vmatprep.subr.bf16.mxu0 0
        %1254 = vmatpush1.bf16.msra.mxu0 %v1251
        %1255 = vmatprep.subr.bf16.mxu0 0
        %1256 = vmatpush1.bf16.msra.mxu0 0
        %1257 = vmatprep.subr.bf16.mxu0 0
        %1258 = vmatpush1.bf16.msra.mxu0 0
        %1259 = vmatprep.subr.bf16.mxu0 0
        %1260 = vmatpush1.bf16.msra.mxu0 0
        %1261 = vmatprep.subr.bf16.mxu0 0
        %1262 = vmatpush1.bf16.msra.mxu0 0
        %1263 = vmatprep.subr.bf16.mxu0 0
        %1264 = vmatpush1.bf16.msra.mxu0 0
        %1265 = vmatprep.subr.bf16.mxu0 0
        %1266 = vmatpush1.bf16.msra.mxu0 0
        %1267 = vmatprep.subr.bf16.mxu0 0
        %1268 = vmatpush1.bf16.msra.mxu0 0
        %1269 = vmatprep.subr.bf16.mxu0 0
        %1270 = vmatpush1.bf16.msra.mxu0 0
        %1271 = vmatprep.subr.bf16.mxu0 0
        %1272 = vmatpush1.bf16.msra.mxu0 0
        %1273 = vmatprep.subr.bf16.mxu0 0
        %1274 = vmatpush1.bf16.msra.mxu0 0
        %1275 = vmatprep.subr.bf16.mxu0 0
        %1276 = vmatpush1.bf16.msra.mxu0 0
        %1277 = vmatprep.subr.bf16.mxu0 0
        %1278 = vmatpush1.bf16.msra.mxu0 0
        %1279 = vmatprep.subr.bf16.mxu0 0
        %1280 = vmatpush1.bf16.msra.mxu0 0
        %1281 = vmatprep.subr.bf16.mxu0 0
        %1282 = vmatpush1.bf16.msra.mxu0 0
        %1283 = vmatprep.subr.bf16.mxu0 0
        %1284 = vmatpush1.bf16.msra.mxu0 0
        %1285 = vmatprep.mubr.bf16.mxu0 0
        %1286 = vmatmul.mubr.bf16.gmra.mrb[0].mxu0 %v1248
        %v1287 = vpop.f32.mrb[0].mxu0
        %v1288 = vadd.f32 0.0, %v1287
        %v1289 = vpop.f32.mrb[0].mxu0
        %v1290 = vpop.f32.mrb[0].mxu0
        %v1291 = vpop.f32.mrb[0].mxu0
        %1292 = vdwg.mxu0
        %v1293 = vmul.f32 %v1288, %v1243
        %v1294 = vpack.c.bf16 %v1293, %v1293
        %v1295 = vld [vmem:[%s2 + $0xc] sm:$0xf]
        %v1297 = vsel %vm506, %v1294, 0
        %v1300 = vsel %vm570, %v1295, 0
        %1302 = vmatprep.subr.bf16.mxu0 0
        %1303 = vmatpush1.bf16.msra.mxu0 %v1300
        %1304 = vmatprep.subr.bf16.mxu0 0
        %1305 = vmatpush1.bf16.msra.mxu0 0
        %1306 = vmatprep.subr.bf16.mxu0 0
        %1307 = vmatpush1.bf16.msra.mxu0 0
        %1308 = vmatprep.subr.bf16.mxu0 0
        %1309 = vmatpush1.bf16.msra.mxu0 0
        %1310 = vmatprep.subr.bf16.mxu0 0
        %1311 = vmatpush1.bf16.msra.mxu0 0
        %1312 = vmatprep.subr.bf16.mxu0 0
        %1313 = vmatpush1.bf16.msra.mxu0 0
        %1314 = vmatprep.subr.bf16.mxu0 0
        %1315 = vmatpush1.bf16.msra.mxu0 0
        %1316 = vmatprep.subr.bf16.mxu0 0
        %1317 = vmatpush1.bf16.msra.mxu0 0
        %1318 = vmatprep.subr.bf16.mxu0 0
        %1319 = vmatpush1.bf16.msra.mxu0 0
        %1320 = vmatprep.subr.bf16.mxu0 0
        %1321 = vmatpush1.bf16.msra.mxu0 0
        %1322 = vmatprep.subr.bf16.mxu0 0
        %1323 = vmatpush1.bf16.msra.mxu0 0
        %1324 = vmatprep.subr.bf16.mxu0 0
        %1325 = vmatpush1.bf16.msra.mxu0 0
        %1326 = vmatprep.subr.bf16.mxu0 0
        %1327 = vmatpush1.bf16.msra.mxu0 0
        %1328 = vmatprep.subr.bf16.mxu0 0
        %1329 = vmatpush1.bf16.msra.mxu0 0
        %1330 = vmatprep.subr.bf16.mxu0 0
        %1331 = vmatpush1.bf16.msra.mxu0 0
        %1332 = vmatprep.subr.bf16.mxu0 0
        %1333 = vmatpush1.bf16.msra.mxu0 0
        %1334 = vmatprep.mubr.bf16.mxu0 0
        %1335 = vmatmul.mubr.bf16.gmra.mrb[0].mxu0 %v1297
        %v1336 = vpop.f32.mrb[0].mxu0
        %v1337 = vadd.f32 0.0, %v1336
        %v1338 = vpop.f32.mrb[0].mxu0
        %v1339 = vpop.f32.mrb[0].mxu0
        %v1340 = vpop.f32.mrb[0].mxu0
        %1341 = vdwg.mxu0
        %v1342 = vadd.f32 %v1115, %v1337
        %v1343 = vadd.f32 %v356, %v1342
        %v1344 = vmul.f32 %v1343, %v1343
        %v1345 = vsel %vm358, %v1344, 0.0
        %1346 = vadd.xlane.f32.xlu0 %v1345
        %v1347 = vpop.xlane.xlu0 %1346
        %v1348 = vmul.f32 %v1347, %v362
        %v1349 = vadd.f32 %v1348, 1e-05
        %v1350 = vrsqrt.pop %v1349
        %v1351 = vmul.f32 %v1343, %v1350
        %v1352 = vld [vmem:[%s6] sm:$0x1]
        %v1354 = vlaneseq
        %v1355 = vshrl.u32 %v1354, 7
        %v1356 = vsub.s32 0, %v1355
        %v1357 = vrot.slane %v1352, %v1356
        %v1359 = vmul.f32 %v1351, %v1357
        %v1360 = vpack.c.bf16 %v1359, %v1359
        %v1361 = vld [vmem:[%s7] sm:$0xff]
        %v1362 = vld [vmem:[%s7 + $0x8] sm:$0xff]
        %v1363 = vld [vmem:[%s7 + $0x10] sm:$0xff]
        %v1364 = vld [vmem:[%s7 + $0x18] sm:$0xff]
        %v1369 = vunpack.c.l.b16 %v1361
        %v1370 = vunpack.c.h.b16 %v1361
        %v1371 = vunpack.c.l.b16 %v1362
        %v1372 = vunpack.c.h.b16 %v1362
        %v1373 = vunpack.c.l.b16 %v1363
        %v1374 = vunpack.c.h.b16 %v1363
        %v1375 = vunpack.c.l.b16 %v1364
        %v1376 = vunpack.c.h.b16 %v1364
        %v1377 = vpack.c.b16 %v1371, %v1369
        %v1378 = vpack.c.b16 %v1372, %v1370
        %v1379 = vpack.c.b16 %v1375, %v1373
        %v1380 = vpack.c.b16 %v1376, %v1374
        %v1386 = vsel %vm358, %v1360, 0
        %1388 = vmatprep.subr.bf16.mxu0 %v1378
        %1389 = vmatpush1.bf16.msra.mxu0 %v1377
        %1390 = vmatprep.subr.bf16.mxu0 %v1380
        %1391 = vmatpush1.bf16.msra.mxu0 %v1379
        %1392 = vmatprep.subr.bf16.mxu0 0
        %1393 = vmatpush1.bf16.msra.mxu0 0
        %1394 = vmatprep.subr.bf16.mxu0 0
        %1395 = vmatpush1.bf16.msra.mxu0 0
        %1396 = vmatprep.subr.bf16.mxu0 0
        %1397 = vmatpush1.bf16.msra.mxu0 0
        %1398 = vmatprep.subr.bf16.mxu0 0
        %1399 = vmatpush1.bf16.msra.mxu0 0
        %1400 = vmatprep.subr.bf16.mxu0 0
        %1401 = vmatpush1.bf16.msra.mxu0 0
        %1402 = vmatprep.subr.bf16.mxu0 0
        %1403 = vmatpush1.bf16.msra.mxu0 0
        %1404 = vmatprep.subr.bf16.mxu0 0
        %1405 = vmatpush1.bf16.msra.mxu0 0
        %1406 = vmatprep.subr.bf16.mxu0 0
        %1407 = vmatpush1.bf16.msra.mxu0 0
        %1408 = vmatprep.subr.bf16.mxu0 0
        %1409 = vmatpush1.bf16.msra.mxu0 0
        %1410 = vmatprep.subr.bf16.mxu0 0
        %1411 = vmatpush1.bf16.msra.mxu0 0
        %1412 = vmatprep.subr.bf16.mxu0 0
        %1413 = vmatpush1.bf16.msra.mxu0 0
        %1414 = vmatprep.subr.bf16.mxu0 0
        %1415 = vmatpush1.bf16.msra.mxu0 0
        %1416 = vmatprep.subr.bf16.mxu0 0
        %1417 = vmatpush1.bf16.msra.mxu0 0
        %1418 = vmatprep.subr.bf16.mxu0 0
        %1419 = vmatpush1.bf16.msra.mxu0 0
        %1420 = vmatprep.mubr.bf16.mxu0 0
        %1421 = vmatmul.mubr.bf16.gmra.mrb[0].mxu0 %v1386
        %v1422 = vpop.f32.mrb[0].mxu0
        %v1423 = vadd.f32 0.0, %v1422
        %v1424 = vpop.f32.mrb[0].mxu0
        %v1425 = vadd.f32 0.0, %v1424
        %v1426 = vpop.f32.mrb[0].mxu0
        %v1427 = vpop.f32.mrb[0].mxu0
        %1428 = vdwg.mxu0
        %v1429 = vld [vmem:[%s8] sm:$0xff]
        %v1430 = vld [vmem:[%s8 + $0x8] sm:$0xff]
        %v1431 = vld [vmem:[%s8 + $0x10] sm:$0xff]
        %v1432 = vld [vmem:[%s8 + $0x18] sm:$0xff]
        %v1437 = vunpack.c.l.b16 %v1429
        %v1438 = vunpack.c.h.b16 %v1429
        %v1439 = vunpack.c.l.b16 %v1430
        %v1440 = vunpack.c.h.b16 %v1430
        %v1441 = vunpack.c.l.b16 %v1431
        %v1442 = vunpack.c.h.b16 %v1431
        %v1443 = vunpack.c.l.b16 %v1432
        %v1444 = vunpack.c.h.b16 %v1432
        %v1445 = vpack.c.b16 %v1439, %v1437
        %v1446 = vpack.c.b16 %v1440, %v1438
        %v1447 = vpack.c.b16 %v1443, %v1441
        %v1448 = vpack.c.b16 %v1444, %v1442
        %1453 = vmatprep.subr.bf16.mxu0 %v1446
        %1454 = vmatpush1.bf16.msra.mxu0 %v1445
        %1455 = vmatprep.subr.bf16.mxu0 %v1448
        %1456 = vmatpush1.bf16.msra.mxu0 %v1447
        %1457 = vmatprep.subr.bf16.mxu0 0
        %1458 = vmatpush1.bf16.msra.mxu0 0
        %1459 = vmatprep.subr.bf16.mxu0 0
        %1460 = vmatpush1.bf16.msra.mxu0 0
        %1461 = vmatprep.subr.bf16.mxu0 0
        %1462 = vmatpush1.bf16.msra.mxu0 0
        %1463 = vmatprep.subr.bf16.mxu0 0
        %1464 = vmatpush1.bf16.msra.mxu0 0
        %1465 = vmatprep.subr.bf16.mxu0 0
        %1466 = vmatpush1.bf16.msra.mxu0 0
        %1467 = vmatprep.subr.bf16.mxu0 0
        %1468 = vmatpush1.bf16.msra.mxu0 0
        %1469 = vmatprep.subr.bf16.mxu0 0
        %1470 = vmatpush1.bf16.msra.mxu0 0
        %1471 = vmatprep.subr.bf16.mxu0 0
        %1472 = vmatpush1.bf16.msra.mxu0 0
        %1473 = vmatprep.subr.bf16.mxu0 0
        %1474 = vmatpush1.bf16.msra.mxu0 0
        %1475 = vmatprep.subr.bf16.mxu0 0
        %1476 = vmatpush1.bf16.msra.mxu0 0
        %1477 = vmatprep.subr.bf16.mxu0 0
        %1478 = vmatpush1.bf16.msra.mxu0 0
        %1479 = vmatprep.subr.bf16.mxu0 0
        %1480 = vmatpush1.bf16.msra.mxu0 0
        %1481 = vmatprep.subr.bf16.mxu0 0
        %1482 = vmatpush1.bf16.msra.mxu0 0
        %1483 = vmatprep.subr.bf16.mxu0 0
        %1484 = vmatpush1.bf16.msra.mxu0 0
        %1485 = vmatprep.mubr.bf16.mxu0 0
        %1486 = vmatmul.mubr.bf16.gmra.mrb[0].mxu0 %v1386
        %v1487 = vpop.f32.mrb[0].mxu0
        %v1488 = vadd.f32 0.0, %v1487
        %v1489 = vpop.f32.mrb[0].mxu0
        %v1490 = vadd.f32 0.0, %v1489
        %v1491 = vpop.f32.mrb[0].mxu0
        %v1492 = vpop.f32.mrb[0].mxu0
        %1493 = vdwg.mxu0
        %v1494 = vxor.u32 %v1423, 2147483648
        %v1495 = vxor.u32 %v1425, 2147483648
        %v1496 = vmul.f32 %v1494, 1.442695
        %v1497 = vpow.pop %v1496
        %v1498 = vmul.f32 %v1495, 1.442695
        %v1499 = vpow.pop %v1498
        %v1500 = vadd.f32 %v1497, 1.0
        %v1501 = vadd.f32 %v1499, 1.0
        %v1502 = vrcp.pop %v1500
        %v1503 = vmul.f32 1.0, %v1502
        %v1504 = vrcp.pop %v1501
        %v1505 = vmul.f32 1.0, %v1504
        %v1506 = vmul.f32 %v1423, %v1503
        %v1507 = vmul.f32 %v1425, %v1505
        %v1508 = vmul.f32 %v1506, %v1488
        %v1509 = vmul.f32 %v1507, %v1490
        %v1510 = vpack.c.bf16 %v1508, %v1508
        %v1511 = vpack.c.bf16 %v1509, %v1509
        %v1512 = vld [vmem:[%s9] sm:$0xf]
        %v1513 = vld [vmem:[%s9 + $0x4] sm:$0xf]
        %v1514 = vld [vmem:[%s9 + $0x8] sm:$0xf]
        %v1515 = vld [vmem:[%s9 + $0xc] sm:$0xf]
        %v1516 = vld [vmem:[%s9 + $0x10] sm:$0xf]
        %v1517 = vld [vmem:[%s9 + $0x14] sm:$0xf]
        %v1518 = vld [vmem:[%s9 + $0x18] sm:$0xf]
        %v1519 = vld [vmem:[%s9 + $0x1c] sm:$0xf]
        %v1520 = vld [vmem:[%s9 + $0x20] sm:$0xf]
        %v1521 = vld [vmem:[%s9 + $0x24] sm:$0xf]
        %v1522 = vld [vmem:[%s9 + $0x28] sm:$0xf]
        %v1523 = vld [vmem:[%s9 + $0x2c] sm:$0xf]
        %v1524 = vld [vmem:[%s9 + $0x30] sm:$0xf]
        %v1525 = vld [vmem:[%s9 + $0x34] sm:$0xf]
        %v1526 = vld [vmem:[%s9 + $0x38] sm:$0xf]
        %v1527 = vld [vmem:[%s9 + $0x3c] sm:$0xf]
        %v1528 = vld [vmem:[%s9 + $0x40] sm:$0xf]
        %v1529 = vld [vmem:[%s9 + $0x44] sm:$0xf]
        %v1530 = vld [vmem:[%s9 + $0x48] sm:$0xf]
        %v1531 = vld [vmem:[%s9 + $0x4c] sm:$0xf]
        %v1532 = vld [vmem:[%s9 + $0x50] sm:$0xf]
        %v1533 = vld [vmem:[%s9 + $0x54] sm:$0xf]
        %v1534 = vld [vmem:[%s9 + $0x58] sm:$0xf]
        %v1535 = vld [vmem:[%s9 + $0x5c] sm:$0xf]
        %v1536 = vld [vmem:[%s9 + $0x60] sm:$0xf]
        %v1537 = vld [vmem:[%s9 + $0x64] sm:$0xf]
        %v1538 = vld [vmem:[%s9 + $0x68] sm:$0xf]
        %v1539 = vld [vmem:[%s9 + $0x6c] sm:$0xf]
        %v1540 = vld [vmem:[%s9 + $0x70] sm:$0xf]
        %v1541 = vld [vmem:[%s9 + $0x74] sm:$0xf]
        %v1542 = vld [vmem:[%s9 + $0x78] sm:$0xf]
        %v1543 = vld [vmem:[%s9 + $0x7c] sm:$0xf]
        %v1576 = vunpack.c.l.b16 %v1512
        %v1577 = vunpack.c.l.b16 %v1513
        %v1578 = vunpack.c.l.b16 %v1514
        %v1579 = vunpack.c.l.b16 %v1515
        %v1580 = vunpack.c.l.b16 %v1516
        %v1581 = vunpack.c.l.b16 %v1517
        %v1582 = vunpack.c.l.b16 %v1518
        %v1583 = vunpack.c.l.b16 %v1519
        %v1584 = vunpack.c.l.b16 %v1520
        %v1585 = vunpack.c.l.b16 %v1521
        %v1586 = vunpack.c.l.b16 %v1522
        %v1587 = vunpack.c.l.b16 %v1523
        %v1588 = vunpack.c.l.b16 %v1524
        %v1589 = vunpack.c.l.b16 %v1525
        %v1590 = vunpack.c.l.b16 %v1526
        %v1591 = vunpack.c.l.b16 %v1527
        %v1592 = vunpack.c.l.b16 %v1528
        %v1593 = vunpack.c.l.b16 %v1529
        %v1594 = vunpack.c.l.b16 %v1530
        %v1595 = vunpack.c.l.b16 %v1531
        %v1596 = vunpack.c.l.b16 %v1532
        %v1597 = vunpack.c.l.b16 %v1533
        %v1598 = vunpack.c.l.b16 %v1534
        %v1599 = vunpack.c.l.b16 %v1535
        %v1600 = vunpack.c.l.b16 %v1536
        %v1601 = vunpack.c.l.b16 %v1537
        %v1602 = vunpack.c.l.b16 %v1538
        %v1603 = vunpack.c.l.b16 %v1539
        %v1604 = vunpack.c.l.b16 %v1540
        %v1605 = vunpack.c.l.b16 %v1541
        %v1606 = vunpack.c.l.b16 %v1542
        %v1607 = vunpack.c.l.b16 %v1543
        %v1608 = vpack.c.b16 %v1577, %v1576
        %v1609 = vpack.c.b16 %v1579, %v1578
        %v1610 = vpack.c.b16 %v1581, %v1580
        %v1611 = vpack.c.b16 %v1583, %v1582
        %v1612 = vpack.c.b16 %v1585, %v1584
        %v1613 = vpack.c.b16 %v1587, %v1586
        %v1614 = vpack.c.b16 %v1589, %v1588
        %v1615 = vpack.c.b16 %v1591, %v1590
        %v1616 = vpack.c.b16 %v1593, %v1592
        %v1617 = vpack.c.b16 %v1595, %v1594
        %v1618 = vpack.c.b16 %v1597, %v1596
        %v1619 = vpack.c.b16 %v1599, %v1598
        %v1620 = vpack.c.b16 %v1601, %v1600
        %v1621 = vpack.c.b16 %v1603, %v1602
        %v1622 = vpack.c.b16 %v1605, %v1604
        %v1623 = vpack.c.b16 %v1607, %v1606
        %1640 = vmatprep.subr.bf16.mxu0 0
        %1641 = vmatpush1.bf16.msra.mxu0 %v1608
        %1642 = vmatprep.subr.bf16.mxu0 0
        %1643 = vmatpush1.bf16.msra.mxu0 %v1609
        %1644 = vmatprep.subr.bf16.mxu0 0
        %1645 = vmatpush1.bf16.msra.mxu0 %v1610
        %1646 = vmatprep.subr.bf16.mxu0 0
        %1647 = vmatpush1.bf16.msra.mxu0 %v1611
        %1648 = vmatprep.subr.bf16.mxu0 0
        %1649 = vmatpush1.bf16.msra.mxu0 %v1612
        %1650 = vmatprep.subr.bf16.mxu0 0
        %1651 = vmatpush1.bf16.msra.mxu0 %v1613
        %1652 = vmatprep.subr.bf16.mxu0 0
        %1653 = vmatpush1.bf16.msra.mxu0 %v1614
        %1654 = vmatprep.subr.bf16.mxu0 0
        %1655 = vmatpush1.bf16.msra.mxu0 %v1615
        %1656 = vmatprep.subr.bf16.mxu0 0
        %1657 = vmatpush1.bf16.msra.mxu0 %v1616
        %1658 = vmatprep.subr.bf16.mxu0 0
        %1659 = vmatpush1.bf16.msra.mxu0 %v1617
        %1660 = vmatprep.subr.bf16.mxu0 0
        %1661 = vmatpush1.bf16.msra.mxu0 %v1618
        %1662 = vmatprep.subr.bf16.mxu0 0
        %1663 = vmatpush1.bf16.msra.mxu0 %v1619
        %1664 = vmatprep.subr.bf16.mxu0 0
        %1665 = vmatpush1.bf16.msra.mxu0 %v1620
        %1666 = vmatprep.subr.bf16.mxu0 0
        %1667 = vmatpush1.bf16.msra.mxu0 %v1621
        %1668 = vmatprep.subr.bf16.mxu0 0
        %1669 = vmatpush1.bf16.msra.mxu0 %v1622
        %1670 = vmatprep.subr.bf16.mxu0 0
        %1671 = vmatpush1.bf16.msra.mxu0 %v1623
        %1672 = vmatprep.mubr.bf16.mxu0 %v1511
        %1673 = vmatmul.mubr.bf16.gmra.mrb[0].mxu0 %v1510
        %v1674 = vpop.f32.mrb[0].mxu0
        %v1675 = vadd.f32 0.0, %v1674
        %v1676 = vpop.f32.mrb[0].mxu0
        %v1677 = vpop.f32.mrb[0].mxu0
        %v1678 = vpop.f32.mrb[0].mxu0
        %1679 = vdwg.mxu0
        %v1680 = vadd.f32 %v1343, %v1675
        %1681 = vst.msk [vmem:[%s350] sm:$0xff] %vm358, %v1680
        %s1682 = sand.u32 %s247, 1
        %s1683 = scalar_lea.sflag [#allocation3], %s1682
        %s1684 = sand.u32 %s247, 1
        %s1685 = smul.addr %s1684, 8
        %s1686 = scalar_lea.vmem [#allocation2], %s1685
        // Predicated region
        $region61: #{tpu_custom_call.1} parent=59 // pred_check
          %p1687 = pneg %p257
        $region62: #{tpu_custom_call.1} parent=59 // pred_check_branch
          %1689 = sbr.rel (%p1687) target = $region64
        $region63: #{tpu_custom_call.1} parent=59 // pred_region
          %s1691 = ssub.s32 128, 128
          %1692 = vsyncadd %s1683, %s1691
          %s1693 = smul.addr %s24, 128
          %s1694 = scalar_lea.hbm %s10, %s1693
          %s1696 = sshll.u32 %s1686, 4
          %s1697 = int_to_ptr.vmem [resolvable:$true] %s1696
          %1699 = dma.vmem_to_hbm [thread:$0]  %s1697, 128, %s1694, %s1683
        $region64: #{tpu_custom_call.1} parent=59 // pred_fallthru
          _
      $region60: #{tpu_custom_call.1} parent=5 // pred_fallthru
        _
      %p1700 = scmp.le.s32.totalorder 2, %s19
      // Predicated region
      $region65: #{tpu_custom_call.1} parent=5 // pred_check
        %p1701 = pneg %p1700
      $region66: #{tpu_custom_call.1} parent=5 // pred_check_branch
        %1703 = sbr.rel (%p1701) target = $region68
      $region67: #{tpu_custom_call.1} parent=5 // pred_region
        %s1704 = ssub.s32 %s19, 2
        // Predicated region
        $region69: #{tpu_custom_call.1} parent=67 // pred_check
          %p1705 = pneg %p263
        $region70: #{tpu_custom_call.1} parent=67 // pred_check_branch
          %1707 = sbr.rel (%p1705) target = $region72
        $region71: #{tpu_custom_call.1} parent=67 // pred_region
          %s1708 = sand.u32 %s248, 1
          %s1709 = scalar_lea.sflag [#allocation3], %s1708
          %s1710 = sand.u32 %s248, 1
          %s1711 = smul.addr %s1710, 8
          %s1712 = scalar_lea.vmem [#allocation2], %s1711
          %1713 = dma.done %s1709, 128
        $region72: #{tpu_custom_call.1} parent=67 // pred_fallthru
          _
      $region68: #{tpu_custom_call.1} parent=5 // pred_fallthru
        _
    $region6: #{tpu_custom_call.1} parent=1 // loop_footer
      %s23 = sadd.s32 1, %s19
    $region7: #{tpu_custom_call.1} parent=1 // loop_footer_branch
      %18 = sbr.rel target = $region3
    $region8: #{tpu_custom_call.1} parent=1 // loop_exit
      _
    %1714 = vsyncpa [#allocation3], 1
    %s1715 = scalar_lea.sflag [#allocation3], 1
    %1716 = vsyncpa %s1715, 1

</llo_original>
